<compile_context>
chip_gen: v5e
topology: v5e:2x2
jax: 0.10.0
libtpu: 0.0.40
codegen_flags: <defaults>
</compile_context>

<pallas_src>
import functools

import jax
import jax.numpy as jnp
from jax.experimental import pallas as pl
from jax.experimental.pallas import tpu as pltpu

LEAKY_SLOPE = 0.1  # nn.LeakyReLU(0.1) in the original module


def _leaky(x):
    return jnp.where(x > 0, x, LEAKY_SLOPE * x)


# -----------------------------------------------------------------------------
# Fused kernel
# -----------------------------------------------------------------------------
def _fused_sap_kernel(prev_ref,                     # [B] int32  (SMEM scalar prefetch)
                      s_tile_ref,                   # [TM, V] bf16 (current S row tile)
                      s_hbm_ref,                    # [V, V]  f32  (raw HBM, row gather)
                      e_ref,                        # [V, R]  bf16 (resident)
                      w1t_ref, b1_ref,              # [R, R] bf16, [1, R] f32
                      w2t_ref, b2_ref,
                      w3t_ref, b3_ref,
                      h_ref,                        # [B, R] f32
                      wft_ref, bf_ref,              # [2R, R] f32, [1, R] f32
                      out_ref,                      # [B, R] f32
                      x2_buf,                       # [V, R] bf16 scratch (full x2)
                      s_rows,                       # [B, V] f32  scratch (S[prev])
                      gsem):                        # DMA semaphores, [B]
    i = pl.program_id(0)
    nt = pl.num_programs(0)
    tm = s_tile_ref.shape[0]
    bsz = s_rows.shape[0]
    f32, bf16 = jnp.float32, jnp.bfloat16

    def _gather_copy(b):
        return pltpu.make_async_copy(
            s_hbm_ref.at[pl.ds(prev_ref[b], 1), :],
            s_rows.at[pl.ds(b, 1), :],
            gsem.at[b])

    # Kick off the S[previous_attr] row gather on the first step so the DMAs
    # overlap the whole streamed x2 phase.
    @pl.when(i == 0)
    def _start_gather():
        for b in range(bsz):
            _gather_copy(b).start()

    # ---- phase 1: x2 rows for this S row tile (all V rows, streamed) --------
    x1 = jnp.dot(s_tile_ref[...], e_ref[...], preferred_element_type=f32)
    z1 = jnp.dot(x1.astype(bf16), w1t_ref[...], preferred_element_type=f32) + b1_ref[...]
    x2 = _leaky(z1)                                  # dropout: identity (eval)
    row0 = pl.multiple_of(i * tm, tm)
    x2_buf[pl.ds(row0, tm), :] = x2.astype(bf16)

    # ---- phase 2 (last step only): B-row tail + folded-concat logits --------
    @pl.when(i == nt - 1)
    def _tail():
        for b in range(bsz):
            _gather_copy(b).wait()
        s_b = s_rows[...].astype(bf16)                                   # [B, V]
        x3 = jnp.dot(s_b, x2_buf[...], preferred_element_type=f32)       # [B, R]
        z2 = jnp.dot(x3.astype(bf16), w2t_ref[...], preferred_element_type=f32) + b2_ref[...]
        x4 = _leaky(z2)
        x5 = jnp.dot(x4.astype(bf16), w3t_ref[...], preferred_element_type=f32) + b3_ref[...]
        feat = jnp.concatenate([h_ref[...], x5], axis=1)                 # [B, 2R] f32
        logits = jnp.dot(feat, wft_ref[...], preferred_element_type=f32) + bf_ref[...]
        out_ref[...] = logits.astype(out_ref.dtype)


# -----------------------------------------------------------------------------
# Wrapper
# -----------------------------------------------------------------------------
def prepare_params(params):
    """One-time transpose / cast of PyTorch-layout parameters (not per call)."""
    f32, bf16 = jnp.float32, jnp.bfloat16
    R = params["attr_fc_w"].shape[0]
    return {
        "w1t": jnp.asarray(params["attr_fc_w"], f32).T.astype(bf16),   # [R, R]
        "w2t": jnp.asarray(params["attr_fc2_w"], f32).T.astype(bf16),
        "w3t": jnp.asarray(params["attr_fc3_w"], f32).T.astype(bf16),
        "b1": jnp.asarray(params["attr_fc_b"], f32).reshape(1, R),
        "b2": jnp.asarray(params["attr_fc2_b"], f32).reshape(1, R),
        "b3": jnp.asarray(params["attr_fc3_b"], f32).reshape(1, R),
        "wft": jnp.asarray(params["f2logit_w"], f32).T,                 # [2R, R]
        "bf": jnp.asarray(params["f2logit_b"], f32).reshape(1, R),
    }


def _pick_row_tile(V):
    for tm in (512, 256, 128):
        if V % tm == 0:
            return tm
    return V  # small / odd vocab: one full-row block


def subsequent_attribute_predictor_forward(prep, word_embedding, h_att,
                                           previous_attr, subsequent_mat):
    V, R = word_embedding.shape
    B = h_att.shape[0]
    TM = _pick_row_tile(V)
    nt = V // TM

    s_f32 = subsequent_mat.astype(jnp.float32)      # gather source (32-bit rows)
    s_bf = s_f32.astype(jnp.bfloat16)               # MXU operand
    e_bf = word_embedding.astype(jnp.bfloat16)
    h32 = h_att.astype(jnp.float32)
    prev = previous_attr.astype(jnp.int32)

    def const(shape):   # resident block: constant index_map, DMA'd once
        return pl.BlockSpec(shape, lambda i, prev_ref: tuple(0 for _ in shape))

    grid_spec = pltpu.PrefetchScalarGridSpec(
        num_scalar_prefetch=1,
        grid=(nt,),
        in_specs=[
            pl.BlockSpec((TM, V), lambda i, prev_ref: (i, 0)),   # S row tile (bf16)
            pl.BlockSpec(memory_space=pl.ANY),                   # S in HBM (f32) for gather
            const((V, R)),                                       # E
            const((R, R)), const((1, R)),                        # attr_fc
            const((R, R)), const((1, R)),                        # attr_fc2
            const((R, R)), const((1, R)),                        # attr_fc3
            const((B, R)),                                       # h_att
            const((2 * R, R)), const((1, R)),                    # f2logit (concat folded)
        ],
        out_specs=pl.BlockSpec((B, R), lambda i, prev_ref: (0, 0)),
        scratch_shapes=[
            pltpu.VMEM((V, R), jnp.bfloat16),    # full x2
            pltpu.VMEM((B, V), jnp.float32),     # gathered S[previous_attr]
            pltpu.SemaphoreType.DMA((B,)),
        ],
    )

    return pl.pallas_call(
        _fused_sap_kernel,
        out_shape=jax.ShapeDtypeStruct((B, R), jnp.float32),
        grid_spec=grid_spec,
        compiler_params=pltpu.CompilerParams(
            dimension_semantics=("arbitrary",)),   # x2 scratch carried across steps
    )(prev, s_bf, s_f32, e_bf,
      prep["w1t"], prep["b1"], prep["w2t"], prep["b2"], prep["w3t"], prep["b3"],
      h32, prep["wft"], prep["bf"])


# -----------------------------------------------------------------------------
# Param init (xavier_normal_ for 2-D weights, zeros for biases) and references
# -----------------------------------------------------------------------------
def _xavier_normal(key, shape):
    fan_out, fan_in = shape
    std = (2.0 / (fan_in + fan_out)) ** 0.5
    return std * jax.random.normal(key, shape, dtype=jnp.float32)


def init_params(key, rnn_size):
    R = rnn_size
    ks = jax.random.split(key, 4)
    return {
        "f2logit_w": _xavier_normal(ks[0], (R, 2 * R)),
        "f2logit_b": jnp.zeros((R,), jnp.float32),
        "attr_fc_w": _xavier_normal(ks[1], (R, R)),
        "attr_fc_b": jnp.zeros((R,), jnp.float32),
        "attr_fc2_w": _xavier_normal(ks[2], (R, R)),
        "attr_fc2_b": jnp.zeros((R,), jnp.float32),
        "attr_fc3_w": _xavier_normal(ks[3], (R, R)),
        "attr_fc3_b": jnp.zeros((R,), jnp.float32),
    }


def _reference_f32(params, word_embedding, h_att, previous_attr, subsequent_mat):
    x1 = subsequent_mat @ word_embedding
    x2 = _leaky(x1 @ params["attr_fc_w"].T + params["attr_fc_b"])
    x3 = subsequent_mat @ x2
    x4 = _leaky(x3 @ params["attr_fc2_w"].T + params["attr_fc2_b"])
    x5 = x4 @ params["attr_fc3_w"].T + params["attr_fc3_b"]
    emb = x5[previous_attr]
    feat = jnp.concatenate([h_att, emb], axis=1)
    return feat @ params["f2logit_w"].T + params["f2logit_b"]


def _reference_mixed(params, word_embedding, h_att, previous_attr, subsequent_mat):
    """Same mixed-precision scheme as the kernel (bf16 MXU operands, f32 accumulate)."""
    f32, bf16 = jnp.float32, jnp.bfloat16
    S = subsequent_mat.astype(bf16)
    E = word_embedding.astype(bf16)
    x1 = jnp.dot(S, E, preferred_element_type=f32)
    z1 = jnp.dot(x1.astype(bf16), params["attr_fc_w"].T.astype(bf16),
                 preferred_element_type=f32) + params["attr_fc_b"]
    x2 = _leaky(z1).astype(bf16)
    s_b = subsequent_mat[previous_attr].astype(bf16)
    x3 = jnp.dot(s_b, x2, preferred_element_type=f32)
    z2 = jnp.dot(x3.astype(bf16), params["attr_fc2_w"].T.astype(bf16),
                 preferred_element_type=f32) + params["attr_fc2_b"]
    x4 = _leaky(z2)
    x5 = jnp.dot(x4.astype(bf16), params["attr_fc3_w"].T.astype(bf16),
                 preferred_element_type=f32) + params["attr_fc3_b"]
    feat = jnp.concatenate([h_att, x5], axis=1)
    return jnp.dot(feat, params["f2logit_w"].T, preferred_element_type=f32) + params["f2logit_b"]


if __name__ == "__main__":
    key = jax.random.PRNGKey(0)
    R = 128      # rnn_size
    V = 128      # attribute vocab size (rows of word_embedding / subsequent_mat)
    B = 8        # batch

    k_p, k_e, k_h, k_s, k_i = jax.random.split(key, 5)
    params = init_params(k_p, R)
    word_embedding = jax.random.normal(k_e, (V, R), dtype=jnp.float32)
    h_att = jax.random.normal(k_h, (B, R), dtype=jnp.float32)
    subsequent_mat = jax.random.uniform(k_s, (V, V), dtype=jnp.float32)
    previous_attr = jax.random.randint(k_i, (B,), 0, V, dtype=jnp.int32)

    prep = prepare_params(params)
    fwd = jax.jit(subsequent_attribute_predictor_forward)
    logits = jax.block_until_ready(
        fwd(prep, word_embedding, h_att, previous_attr, subsequent_mat))

    assert logits.shape == (B, R)

    # Check against a reference with the exact same mixed-precision scheme.
    ref_mixed = _reference_mixed(params, word_embedding, h_att, previous_attr, subsequent_mat)
    assert jnp.allclose(logits, ref_mixed, rtol=2e-2, atol=1.0), \
        "mismatch vs precision-matched reference"

    # Global sanity check against the full-f32 PyTorch-equivalent reference
    # (bf16 MXU operands introduce sub-percent relative error).
    ref_f32 = _reference_f32(params, word_embedding, h_att, previous_attr, subsequent_mat)
    rel = float(jnp.max(jnp.abs(logits - ref_f32)) / (jnp.max(jnp.abs(ref_f32)) + 1e-6))
    assert rel < 5e-2, f"too far from f32 reference: rel={rel}"

    print("KERNEL_OK")
</pallas_src>

<mosaic_0001>
module attributes {stable_mosaic.version = 11 : i64} {
  func.func @_fused_sap_kernel(%arg0: i32, %arg1: memref<8xi32, #tpu.memory_space<smem>>, %arg2: memref<128x128xbf16, #tpu.memory_space<vmem>>, %arg3: memref<128x128xf32, #tpu.memory_space<any>>, %arg4: memref<128x128xbf16, #tpu.memory_space<vmem>>, %arg5: memref<128x128xbf16, #tpu.memory_space<vmem>>, %arg6: memref<1x128xf32, #tpu.memory_space<vmem>>, %arg7: memref<128x128xbf16, #tpu.memory_space<vmem>>, %arg8: memref<1x128xf32, #tpu.memory_space<vmem>>, %arg9: memref<128x128xbf16, #tpu.memory_space<vmem>>, %arg10: memref<1x128xf32, #tpu.memory_space<vmem>>, %arg11: memref<8x128xf32, #tpu.memory_space<vmem>>, %arg12: memref<256x128xf32, #tpu.memory_space<vmem>>, %arg13: memref<1x128xf32, #tpu.memory_space<vmem>>, %arg14: memref<8x128xf32, #tpu.memory_space<vmem>>, %arg15: memref<128x128xbf16, #tpu.memory_space<vmem>>, %arg16: memref<8x128xf32, #tpu.memory_space<vmem>>, %arg17: memref<8x!tpu.dma_semaphore, #tpu.memory_space<semaphore_mem>>) attributes {dimension_semantics = [#tpu.dimension_semantics<arbitrary>], iteration_bounds = array<i64: 1>, scalar_prefetch = 1 : i64, scratch_operands = 3 : i64, tpu.core_type = #tpu.core_type<tc>, window_params = [{transform_indices = @transform_0, window_bounds = array<i64: 128, 128>}, {}, {pipeline_mode = #tpu.pipeline_mode<synchronous>, transform_indices = @transform_2, window_bounds = array<i64: 128, 128>}, {pipeline_mode = #tpu.pipeline_mode<synchronous>, transform_indices = @transform_3, window_bounds = array<i64: 128, 128>}, {pipeline_mode = #tpu.pipeline_mode<synchronous>, transform_indices = @transform_4, window_bounds = array<i64: 1, 128>}, {pipeline_mode = #tpu.pipeline_mode<synchronous>, transform_indices = @transform_5, window_bounds = array<i64: 128, 128>}, {pipeline_mode = #tpu.pipeline_mode<synchronous>, transform_indices = @transform_6, window_bounds = array<i64: 1, 128>}, {pipeline_mode = #tpu.pipeline_mode<synchronous>, transform_indices = @transform_7, window_bounds = array<i64: 128, 128>}, {pipeline_mode = #tpu.pipeline_mode<synchronous>, transform_indices = @transform_8, window_bounds = array<i64: 1, 128>}, {pipeline_mode = #tpu.pipeline_mode<synchronous>, transform_indices = @transform_9, window_bounds = array<i64: 8, 128>}, {pipeline_mode = #tpu.pipeline_mode<synchronous>, transform_indices = @transform_10, window_bounds = array<i64: 256, 128>}, {pipeline_mode = #tpu.pipeline_mode<synchronous>, transform_indices = @transform_11, window_bounds = array<i64: 1, 128>}, {pipeline_mode = #tpu.pipeline_mode<synchronous>, transform_indices = @transform_12, window_bounds = array<i64: 8, 128>}]} {
    %c0_i32 = arith.constant 0 : i32
    %0 = arith.cmpi eq, %arg0, %c0_i32 : i32
    %1 = arith.extui %0 : i1 to i32
    %c0_i32_0 = arith.constant 0 : i32
    %2 = arith.cmpi ne, %1, %c0_i32_0 : i32
    scf.if %2 {
      %c0_14 = arith.constant 0 : index
      %25 = memref.load %arg1[%c0_14] : memref<8xi32, #tpu.memory_space<smem>>
      %c0_i32_15 = arith.constant 0 : i32
      %c0_i32_16 = arith.constant 0 : i32
      %26 = tpu.memref_slice %arg3[%25, %c0_i32_16] : memref<128x128xf32, #tpu.memory_space<any>> -> memref<1x128xf32, #tpu.memory_space<any>>
      %c0_i32_17 = arith.constant 0 : i32
      %c0_i32_18 = arith.constant 0 : i32
      %27 = tpu.memref_slice %arg16[%c0_i32_17, %c0_i32_18] : memref<8x128xf32, #tpu.memory_space<vmem>> -> memref<1x128xf32, #tpu.memory_space<vmem>>
      %28 = tpu.memref_slice %arg17[%c0_i32_15] : memref<8x!tpu.dma_semaphore, #tpu.memory_space<semaphore_mem>> -> memref<1x!tpu.dma_semaphore, #tpu.memory_space<semaphore_mem>>
      %29 = tpu.memref_squeeze %28 : memref<1x!tpu.dma_semaphore, #tpu.memory_space<semaphore_mem>> -> memref<!tpu.dma_semaphore, #tpu.memory_space<semaphore_mem>>
      tpu.enqueue_dma source(%26 : memref<1x128xf32, #tpu.memory_space<any>>) target(%27 : memref<1x128xf32, #tpu.memory_space<vmem>>) target_semaphore(%29 : memref<!tpu.dma_semaphore, #tpu.memory_space<semaphore_mem>>)
      %c1 = arith.constant 1 : index
      %30 = memref.load %arg1[%c1] : memref<8xi32, #tpu.memory_space<smem>>
      %c1_i32 = arith.constant 1 : i32
      %c0_i32_19 = arith.constant 0 : i32
      %31 = tpu.memref_slice %arg3[%30, %c0_i32_19] : memref<128x128xf32, #tpu.memory_space<any>> -> memref<1x128xf32, #tpu.memory_space<any>>
      %c1_i32_20 = arith.constant 1 : i32
      %c0_i32_21 = arith.constant 0 : i32
      %32 = tpu.memref_slice %arg16[%c1_i32_20, %c0_i32_21] : memref<8x128xf32, #tpu.memory_space<vmem>> -> memref<1x128xf32, #tpu.memory_space<vmem>>
      %33 = tpu.memref_slice %arg17[%c1_i32] : memref<8x!tpu.dma_semaphore, #tpu.memory_space<semaphore_mem>> -> memref<1x!tpu.dma_semaphore, #tpu.memory_space<semaphore_mem>>
      %34 = tpu.memref_squeeze %33 : memref<1x!tpu.dma_semaphore, #tpu.memory_space<semaphore_mem>> -> memref<!tpu.dma_semaphore, #tpu.memory_space<semaphore_mem>>
      tpu.enqueue_dma source(%31 : memref<1x128xf32, #tpu.memory_space<any>>) target(%32 : memref<1x128xf32, #tpu.memory_space<vmem>>) target_semaphore(%34 : memref<!tpu.dma_semaphore, #tpu.memory_space<semaphore_mem>>)
      %c2 = arith.constant 2 : index
      %35 = memref.load %arg1[%c2] : memref<8xi32, #tpu.memory_space<smem>>
      %c2_i32 = arith.constant 2 : i32
      %c0_i32_22 = arith.constant 0 : i32
      %36 = tpu.memref_slice %arg3[%35, %c0_i32_22] : memref<128x128xf32, #tpu.memory_space<any>> -> memref<1x128xf32, #tpu.memory_space<any>>
      %c2_i32_23 = arith.constant 2 : i32
      %c0_i32_24 = arith.constant 0 : i32
      %37 = tpu.memref_slice %arg16[%c2_i32_23, %c0_i32_24] : memref<8x128xf32, #tpu.memory_space<vmem>> -> memref<1x128xf32, #tpu.memory_space<vmem>>
      %38 = tpu.memref_slice %arg17[%c2_i32] : memref<8x!tpu.dma_semaphore, #tpu.memory_space<semaphore_mem>> -> memref<1x!tpu.dma_semaphore, #tpu.memory_space<semaphore_mem>>
      %39 = tpu.memref_squeeze %38 : memref<1x!tpu.dma_semaphore, #tpu.memory_space<semaphore_mem>> -> memref<!tpu.dma_semaphore, #tpu.memory_space<semaphore_mem>>
      tpu.enqueue_dma source(%36 : memref<1x128xf32, #tpu.memory_space<any>>) target(%37 : memref<1x128xf32, #tpu.memory_space<vmem>>) target_semaphore(%39 : memref<!tpu.dma_semaphore, #tpu.memory_space<semaphore_mem>>)
      %c3 = arith.constant 3 : index
      %40 = memref.load %arg1[%c3] : memref<8xi32, #tpu.memory_space<smem>>
      %c3_i32 = arith.constant 3 : i32
      %c0_i32_25 = arith.constant 0 : i32
      %41 = tpu.memref_slice %arg3[%40, %c0_i32_25] : memref<128x128xf32, #tpu.memory_space<any>> -> memref<1x128xf32, #tpu.memory_space<any>>
      %c3_i32_26 = arith.constant 3 : i32
      %c0_i32_27 = arith.constant 0 : i32
      %42 = tpu.memref_slice %arg16[%c3_i32_26, %c0_i32_27] : memref<8x128xf32, #tpu.memory_space<vmem>> -> memref<1x128xf32, #tpu.memory_space<vmem>>
      %43 = tpu.memref_slice %arg17[%c3_i32] : memref<8x!tpu.dma_semaphore, #tpu.memory_space<semaphore_mem>> -> memref<1x!tpu.dma_semaphore, #tpu.memory_space<semaphore_mem>>
      %44 = tpu.memref_squeeze %43 : memref<1x!tpu.dma_semaphore, #tpu.memory_space<semaphore_mem>> -> memref<!tpu.dma_semaphore, #tpu.memory_space<semaphore_mem>>
      tpu.enqueue_dma source(%41 : memref<1x128xf32, #tpu.memory_space<any>>) target(%42 : memref<1x128xf32, #tpu.memory_space<vmem>>) target_semaphore(%44 : memref<!tpu.dma_semaphore, #tpu.memory_space<semaphore_mem>>)
      %c4 = arith.constant 4 : index
      %45 = memref.load %arg1[%c4] : memref<8xi32, #tpu.memory_space<smem>>
      %c4_i32 = arith.constant 4 : i32
      %c0_i32_28 = arith.constant 0 : i32
      %46 = tpu.memref_slice %arg3[%45, %c0_i32_28] : memref<128x128xf32, #tpu.memory_space<any>> -> memref<1x128xf32, #tpu.memory_space<any>>
      %c4_i32_29 = arith.constant 4 : i32
      %c0_i32_30 = arith.constant 0 : i32
      %47 = tpu.memref_slice %arg16[%c4_i32_29, %c0_i32_30] : memref<8x128xf32, #tpu.memory_space<vmem>> -> memref<1x128xf32, #tpu.memory_space<vmem>>
      %48 = tpu.memref_slice %arg17[%c4_i32] : memref<8x!tpu.dma_semaphore, #tpu.memory_space<semaphore_mem>> -> memref<1x!tpu.dma_semaphore, #tpu.memory_space<semaphore_mem>>
      %49 = tpu.memref_squeeze %48 : memref<1x!tpu.dma_semaphore, #tpu.memory_space<semaphore_mem>> -> memref<!tpu.dma_semaphore, #tpu.memory_space<semaphore_mem>>
      tpu.enqueue_dma source(%46 : memref<1x128xf32, #tpu.memory_space<any>>) target(%47 : memref<1x128xf32, #tpu.memory_space<vmem>>) target_semaphore(%49 : memref<!tpu.dma_semaphore, #tpu.memory_space<semaphore_mem>>)
      %c5 = arith.constant 5 : index
      %50 = memref.load %arg1[%c5] : memref<8xi32, #tpu.memory_space<smem>>
      %c5_i32 = arith.constant 5 : i32
      %c0_i32_31 = arith.constant 0 : i32
      %51 = tpu.memref_slice %arg3[%50, %c0_i32_31] : memref<128x128xf32, #tpu.memory_space<any>> -> memref<1x128xf32, #tpu.memory_space<any>>
      %c5_i32_32 = arith.constant 5 : i32
      %c0_i32_33 = arith.constant 0 : i32
      %52 = tpu.memref_slice %arg16[%c5_i32_32, %c0_i32_33] : memref<8x128xf32, #tpu.memory_space<vmem>> -> memref<1x128xf32, #tpu.memory_space<vmem>>
      %53 = tpu.memref_slice %arg17[%c5_i32] : memref<8x!tpu.dma_semaphore, #tpu.memory_space<semaphore_mem>> -> memref<1x!tpu.dma_semaphore, #tpu.memory_space<semaphore_mem>>
      %54 = tpu.memref_squeeze %53 : memref<1x!tpu.dma_semaphore, #tpu.memory_space<semaphore_mem>> -> memref<!tpu.dma_semaphore, #tpu.memory_space<semaphore_mem>>
      tpu.enqueue_dma source(%51 : memref<1x128xf32, #tpu.memory_space<any>>) target(%52 : memref<1x128xf32, #tpu.memory_space<vmem>>) target_semaphore(%54 : memref<!tpu.dma_semaphore, #tpu.memory_space<semaphore_mem>>)
      %c6 = arith.constant 6 : index
      %55 = memref.load %arg1[%c6] : memref<8xi32, #tpu.memory_space<smem>>
      %c6_i32 = arith.constant 6 : i32
      %c0_i32_34 = arith.constant 0 : i32
      %56 = tpu.memref_slice %arg3[%55, %c0_i32_34] : memref<128x128xf32, #tpu.memory_space<any>> -> memref<1x128xf32, #tpu.memory_space<any>>
      %c6_i32_35 = arith.constant 6 : i32
      %c0_i32_36 = arith.constant 0 : i32
      %57 = tpu.memref_slice %arg16[%c6_i32_35, %c0_i32_36] : memref<8x128xf32, #tpu.memory_space<vmem>> -> memref<1x128xf32, #tpu.memory_space<vmem>>
      %58 = tpu.memref_slice %arg17[%c6_i32] : memref<8x!tpu.dma_semaphore, #tpu.memory_space<semaphore_mem>> -> memref<1x!tpu.dma_semaphore, #tpu.memory_space<semaphore_mem>>
      %59 = tpu.memref_squeeze %58 : memref<1x!tpu.dma_semaphore, #tpu.memory_space<semaphore_mem>> -> memref<!tpu.dma_semaphore, #tpu.memory_space<semaphore_mem>>
      tpu.enqueue_dma source(%56 : memref<1x128xf32, #tpu.memory_space<any>>) target(%57 : memref<1x128xf32, #tpu.memory_space<vmem>>) target_semaphore(%59 : memref<!tpu.dma_semaphore, #tpu.memory_space<semaphore_mem>>)
      %c7 = arith.constant 7 : index
      %60 = memref.load %arg1[%c7] : memref<8xi32, #tpu.memory_space<smem>>
      %c7_i32 = arith.constant 7 : i32
      %c0_i32_37 = arith.constant 0 : i32
      %61 = tpu.memref_slice %arg3[%60, %c0_i32_37] : memref<128x128xf32, #tpu.memory_space<any>> -> memref<1x128xf32, #tpu.memory_space<any>>
      %c7_i32_38 = arith.constant 7 : i32
      %c0_i32_39 = arith.constant 0 : i32
      %62 = tpu.memref_slice %arg16[%c7_i32_38, %c0_i32_39] : memref<8x128xf32, #tpu.memory_space<vmem>> -> memref<1x128xf32, #tpu.memory_space<vmem>>
      %63 = tpu.memref_slice %arg17[%c7_i32] : memref<8x!tpu.dma_semaphore, #tpu.memory_space<semaphore_mem>> -> memref<1x!tpu.dma_semaphore, #tpu.memory_space<semaphore_mem>>
      %64 = tpu.memref_squeeze %63 : memref<1x!tpu.dma_semaphore, #tpu.memory_space<semaphore_mem>> -> memref<!tpu.dma_semaphore, #tpu.memory_space<semaphore_mem>>
      tpu.enqueue_dma source(%61 : memref<1x128xf32, #tpu.memory_space<any>>) target(%62 : memref<1x128xf32, #tpu.memory_space<vmem>>) target_semaphore(%64 : memref<!tpu.dma_semaphore, #tpu.memory_space<semaphore_mem>>)
    } else {
    }
    %c0 = arith.constant 0 : index
    %c0_1 = arith.constant 0 : index
    %3 = vector.load %arg2[%c0, %c0_1] : memref<128x128xbf16, #tpu.memory_space<vmem>>, vector<128x128xbf16>
    %c0_2 = arith.constant 0 : index
    %c0_3 = arith.constant 0 : index
    %4 = vector.load %arg4[%c0_2, %c0_3] : memref<128x128xbf16, #tpu.memory_space<vmem>>, vector<128x128xbf16>
    %cst = arith.constant dense<0.000000e+00> : vector<128x128xf32>
    %5 = tpu.matmul %3, %4, %cst {dimension_numbers = #tpu.dot_dimension_numbers<[1], [0], [0], [1], [0, 0, 1, 1], [], []>} : vector<128x128xbf16>, vector<128x128xbf16>, vector<128x128xf32> -> vector<128x128xf32>
    %6 = arith.truncf %5 : vector<128x128xf32> to vector<128x128xbf16>
    %c0_4 = arith.constant 0 : index
    %c0_5 = arith.constant 0 : index
    %7 = vector.load %arg5[%c0_4, %c0_5] : memref<128x128xbf16, #tpu.memory_space<vmem>>, vector<128x128xbf16>
    %cst_6 = arith.constant dense<0.000000e+00> : vector<128x128xf32>
    %8 = tpu.matmul %6, %7, %cst_6 {dimension_numbers = #tpu.dot_dimension_numbers<[1], [0], [0], [1], [0, 0, 1, 1], [], []>} : vector<128x128xbf16>, vector<128x128xbf16>, vector<128x128xf32> -> vector<128x128xf32>
    %c0_7 = arith.constant 0 : index
    %c0_8 = arith.constant 0 : index
    %9 = vector.load %arg6[%c0_7, %c0_8] : memref<1x128xf32, #tpu.memory_space<vmem>>, vector<1x128xf32>
    %10 = vector.broadcast %9 : vector<1x128xf32> to vector<128x128xf32>
    %11 = arith.addf %8, %10 : vector<128x128xf32>
    %cst_9 = arith.constant 0.000000e+00 : f32
    %12 = vector.broadcast %cst_9 : f32 to vector<128x128xf32>
    %13 = arith.cmpf ogt, %11, %12 : vector<128x128xf32>
    %cst_10 = arith.constant 1.000000e-01 : f32
    %14 = vector.broadcast %cst_10 : f32 to vector<128x128xf32>
    %15 = arith.mulf %14, %11 : vector<128x128xf32>
    %16 = arith.select %13, %11, %15 : vector<128x128xi1>, vector<128x128xf32>
    %c128_i32 = arith.constant 128 : i32
    %17 = arith.muli %arg0, %c128_i32 : i32
    %18 = tpu.assume_multiple %17, 128 : i32
    %19 = arith.truncf %16 : vector<128x128xf32> to vector<128x128xbf16>
    %20 = arith.index_cast %18 : i32 to index
    %c0_11 = arith.constant 0 : index
    %21 = vector.load %arg15[%20, %c0_11] : memref<128x128xbf16, #tpu.memory_space<vmem>>, vector<128x128xbf16>
    tpu.vector_store %arg15[%20, %c0_11], %19 {strides = array<i32>} : memref<128x128xbf16, #tpu.memory_space<vmem>>, vector<128x128xbf16>,
    %c0_i32_12 = arith.constant 0 : i32
    %22 = arith.cmpi eq, %arg0, %c0_i32_12 : i32
    %23 = arith.extui %22 : i1 to i32
    %c0_i32_13 = arith.constant 0 : i32
    %24 = arith.cmpi ne, %23, %c0_i32_13 : i32
    scf.if %24 {
      %c0_14 = arith.constant 0 : index
      %25 = memref.load %arg1[%c0_14] : memref<8xi32, #tpu.memory_space<smem>>
      %c0_i32_15 = arith.constant 0 : i32
      %c0_i32_16 = arith.constant 0 : i32
      %26 = tpu.memref_slice %arg3[%25, %c0_i32_16] : memref<128x128xf32, #tpu.memory_space<any>> -> memref<1x128xf32, #tpu.memory_space<any>>
      %c0_i32_17 = arith.constant 0 : i32
      %c0_i32_18 = arith.constant 0 : i32
      %27 = tpu.memref_slice %arg16[%c0_i32_17, %c0_i32_18] : memref<8x128xf32, #tpu.memory_space<vmem>> -> memref<1x128xf32, #tpu.memory_space<vmem>>
      %28 = tpu.memref_slice %arg17[%c0_i32_15] : memref<8x!tpu.dma_semaphore, #tpu.memory_space<semaphore_mem>> -> memref<1x!tpu.dma_semaphore, #tpu.memory_space<semaphore_mem>>
      %29 = tpu.memref_squeeze %28 : memref<1x!tpu.dma_semaphore, #tpu.memory_space<semaphore_mem>> -> memref<!tpu.dma_semaphore, #tpu.memory_space<semaphore_mem>>
      tpu.wait_dma2 semaphore(%29 : memref<!tpu.dma_semaphore, #tpu.memory_space<semaphore_mem>>) src(%26 : memref<1x128xf32, #tpu.memory_space<any>>) dst(%27 : memref<1x128xf32, #tpu.memory_space<vmem>>)
      %c1 = arith.constant 1 : index
      %30 = memref.load %arg1[%c1] : memref<8xi32, #tpu.memory_space<smem>>
      %c1_i32 = arith.constant 1 : i32
      %c0_i32_19 = arith.constant 0 : i32
      %31 = tpu.memref_slice %arg3[%30, %c0_i32_19] : memref<128x128xf32, #tpu.memory_space<any>> -> memref<1x128xf32, #tpu.memory_space<any>>
      %c1_i32_20 = arith.constant 1 : i32
      %c0_i32_21 = arith.constant 0 : i32
      %32 = tpu.memref_slice %arg16[%c1_i32_20, %c0_i32_21] : memref<8x128xf32, #tpu.memory_space<vmem>> -> memref<1x128xf32, #tpu.memory_space<vmem>>
      %33 = tpu.memref_slice %arg17[%c1_i32] : memref<8x!tpu.dma_semaphore, #tpu.memory_space<semaphore_mem>> -> memref<1x!tpu.dma_semaphore, #tpu.memory_space<semaphore_mem>>
      %34 = tpu.memref_squeeze %33 : memref<1x!tpu.dma_semaphore, #tpu.memory_space<semaphore_mem>> -> memref<!tpu.dma_semaphore, #tpu.memory_space<semaphore_mem>>
      tpu.wait_dma2 semaphore(%34 : memref<!tpu.dma_semaphore, #tpu.memory_space<semaphore_mem>>) src(%31 : memref<1x128xf32, #tpu.memory_space<any>>) dst(%32 : memref<1x128xf32, #tpu.memory_space<vmem>>)
      %c2 = arith.constant 2 : index
      %35 = memref.load %arg1[%c2] : memref<8xi32, #tpu.memory_space<smem>>
      %c2_i32 = arith.constant 2 : i32
      %c0_i32_22 = arith.constant 0 : i32
      %36 = tpu.memref_slice %arg3[%35, %c0_i32_22] : memref<128x128xf32, #tpu.memory_space<any>> -> memref<1x128xf32, #tpu.memory_space<any>>
      %c2_i32_23 = arith.constant 2 : i32
      %c0_i32_24 = arith.constant 0 : i32
      %37 = tpu.memref_slice %arg16[%c2_i32_23, %c0_i32_24] : memref<8x128xf32, #tpu.memory_space<vmem>> -> memref<1x128xf32, #tpu.memory_space<vmem>>
      %38 = tpu.memref_slice %arg17[%c2_i32] : memref<8x!tpu.dma_semaphore, #tpu.memory_space<semaphore_mem>> -> memref<1x!tpu.dma_semaphore, #tpu.memory_space<semaphore_mem>>
      %39 = tpu.memref_squeeze %38 : memref<1x!tpu.dma_semaphore, #tpu.memory_space<semaphore_mem>> -> memref<!tpu.dma_semaphore, #tpu.memory_space<semaphore_mem>>
      tpu.wait_dma2 semaphore(%39 : memref<!tpu.dma_semaphore, #tpu.memory_space<semaphore_mem>>) src(%36 : memref<1x128xf32, #tpu.memory_space<any>>) dst(%37 : memref<1x128xf32, #tpu.memory_space<vmem>>)
      %c3 = arith.constant 3 : index
      %40 = memref.load %arg1[%c3] : memref<8xi32, #tpu.memory_space<smem>>
      %c3_i32 = arith.constant 3 : i32
      %c0_i32_25 = arith.constant 0 : i32
      %41 = tpu.memref_slice %arg3[%40, %c0_i32_25] : memref<128x128xf32, #tpu.memory_space<any>> -> memref<1x128xf32, #tpu.memory_space<any>>
      %c3_i32_26 = arith.constant 3 : i32
      %c0_i32_27 = arith.constant 0 : i32
      %42 = tpu.memref_slice %arg16[%c3_i32_26, %c0_i32_27] : memref<8x128xf32, #tpu.memory_space<vmem>> -> memref<1x128xf32, #tpu.memory_space<vmem>>
      %43 = tpu.memref_slice %arg17[%c3_i32] : memref<8x!tpu.dma_semaphore, #tpu.memory_space<semaphore_mem>> -> memref<1x!tpu.dma_semaphore, #tpu.memory_space<semaphore_mem>>
      %44 = tpu.memref_squeeze %43 : memref<1x!tpu.dma_semaphore, #tpu.memory_space<semaphore_mem>> -> memref<!tpu.dma_semaphore, #tpu.memory_space<semaphore_mem>>
      tpu.wait_dma2 semaphore(%44 : memref<!tpu.dma_semaphore, #tpu.memory_space<semaphore_mem>>) src(%41 : memref<1x128xf32, #tpu.memory_space<any>>) dst(%42 : memref<1x128xf32, #tpu.memory_space<vmem>>)
      %c4 = arith.constant 4 : index
      %45 = memref.load %arg1[%c4] : memref<8xi32, #tpu.memory_space<smem>>
      %c4_i32 = arith.constant 4 : i32
      %c0_i32_28 = arith.constant 0 : i32
      %46 = tpu.memref_slice %arg3[%45, %c0_i32_28] : memref<128x128xf32, #tpu.memory_space<any>> -> memref<1x128xf32, #tpu.memory_space<any>>
      %c4_i32_29 = arith.constant 4 : i32
      %c0_i32_30 = arith.constant 0 : i32
      %47 = tpu.memref_slice %arg16[%c4_i32_29, %c0_i32_30] : memref<8x128xf32, #tpu.memory_space<vmem>> -> memref<1x128xf32, #tpu.memory_space<vmem>>
      %48 = tpu.memref_slice %arg17[%c4_i32] : memref<8x!tpu.dma_semaphore, #tpu.memory_space<semaphore_mem>> -> memref<1x!tpu.dma_semaphore, #tpu.memory_space<semaphore_mem>>
      %49 = tpu.memref_squeeze %48 : memref<1x!tpu.dma_semaphore, #tpu.memory_space<semaphore_mem>> -> memref<!tpu.dma_semaphore, #tpu.memory_space<semaphore_mem>>
      tpu.wait_dma2 semaphore(%49 : memref<!tpu.dma_semaphore, #tpu.memory_space<semaphore_mem>>) src(%46 : memref<1x128xf32, #tpu.memory_space<any>>) dst(%47 : memref<1x128xf32, #tpu.memory_space<vmem>>)
      %c5 = arith.constant 5 : index
      %50 = memref.load %arg1[%c5] : memref<8xi32, #tpu.memory_space<smem>>
      %c5_i32 = arith.constant 5 : i32
      %c0_i32_31 = arith.constant 0 : i32
      %51 = tpu.memref_slice %arg3[%50, %c0_i32_31] : memref<128x128xf32, #tpu.memory_space<any>> -> memref<1x128xf32, #tpu.memory_space<any>>
      %c5_i32_32 = arith.constant 5 : i32
      %c0_i32_33 = arith.constant 0 : i32
      %52 = tpu.memref_slice %arg16[%c5_i32_32, %c0_i32_33] : memref<8x128xf32, #tpu.memory_space<vmem>> -> memref<1x128xf32, #tpu.memory_space<vmem>>
      %53 = tpu.memref_slice %arg17[%c5_i32] : memref<8x!tpu.dma_semaphore, #tpu.memory_space<semaphore_mem>> -> memref<1x!tpu.dma_semaphore, #tpu.memory_space<semaphore_mem>>
      %54 = tpu.memref_squeeze %53 : memref<1x!tpu.dma_semaphore, #tpu.memory_space<semaphore_mem>> -> memref<!tpu.dma_semaphore, #tpu.memory_space<semaphore_mem>>
      tpu.wait_dma2 semaphore(%54 : memref<!tpu.dma_semaphore, #tpu.memory_space<semaphore_mem>>) src(%51 : memref<1x128xf32, #tpu.memory_space<any>>) dst(%52 : memref<1x128xf32, #tpu.memory_space<vmem>>)
      %c6 = arith.constant 6 : index
      %55 = memref.load %arg1[%c6] : memref<8xi32, #tpu.memory_space<smem>>
      %c6_i32 = arith.constant 6 : i32
      %c0_i32_34 = arith.constant 0 : i32
      %56 = tpu.memref_slice %arg3[%55, %c0_i32_34] : memref<128x128xf32, #tpu.memory_space<any>> -> memref<1x128xf32, #tpu.memory_space<any>>
      %c6_i32_35 = arith.constant 6 : i32
      %c0_i32_36 = arith.constant 0 : i32
      %57 = tpu.memref_slice %arg16[%c6_i32_35, %c0_i32_36] : memref<8x128xf32, #tpu.memory_space<vmem>> -> memref<1x128xf32, #tpu.memory_space<vmem>>
      %58 = tpu.memref_slice %arg17[%c6_i32] : memref<8x!tpu.dma_semaphore, #tpu.memory_space<semaphore_mem>> -> memref<1x!tpu.dma_semaphore, #tpu.memory_space<semaphore_mem>>
      %59 = tpu.memref_squeeze %58 : memref<1x!tpu.dma_semaphore, #tpu.memory_space<semaphore_mem>> -> memref<!tpu.dma_semaphore, #tpu.memory_space<semaphore_mem>>
      tpu.wait_dma2 semaphore(%59 : memref<!tpu.dma_semaphore, #tpu.memory_space<semaphore_mem>>) src(%56 : memref<1x128xf32, #tpu.memory_space<any>>) dst(%57 : memref<1x128xf32, #tpu.memory_space<vmem>>)
      %c7 = arith.constant 7 : index
      %60 = memref.load %arg1[%c7] : memref<8xi32, #tpu.memory_space<smem>>
      %c7_i32 = arith.constant 7 : i32
      %c0_i32_37 = arith.constant 0 : i32
      %61 = tpu.memref_slice %arg3[%60, %c0_i32_37] : memref<128x128xf32, #tpu.memory_space<any>> -> memref<1x128xf32, #tpu.memory_space<any>>
      %c7_i32_38 = arith.constant 7 : i32
      %c0_i32_39 = arith.constant 0 : i32
      %62 = tpu.memref_slice %arg16[%c7_i32_38, %c0_i32_39] : memref<8x128xf32, #tpu.memory_space<vmem>> -> memref<1x128xf32, #tpu.memory_space<vmem>>
      %63 = tpu.memref_slice %arg17[%c7_i32] : memref<8x!tpu.dma_semaphore, #tpu.memory_space<semaphore_mem>> -> memref<1x!tpu.dma_semaphore, #tpu.memory_space<semaphore_mem>>
      %64 = tpu.memref_squeeze %63 : memref<1x!tpu.dma_semaphore, #tpu.memory_space<semaphore_mem>> -> memref<!tpu.dma_semaphore, #tpu.memory_space<semaphore_mem>>
      tpu.wait_dma2 semaphore(%64 : memref<!tpu.dma_semaphore, #tpu.memory_space<semaphore_mem>>) src(%61 : memref<1x128xf32, #tpu.memory_space<any>>) dst(%62 : memref<1x128xf32, #tpu.memory_space<vmem>>)
      %c0_40 = arith.constant 0 : index
      %c0_41 = arith.constant 0 : index
      %65 = vector.load %arg16[%c0_40, %c0_41] : memref<8x128xf32, #tpu.memory_space<vmem>>, vector<8x128xf32>
      %66 = arith.truncf %65 : vector<8x128xf32> to vector<8x128xbf16>
      %c0_42 = arith.constant 0 : index
      %c0_43 = arith.constant 0 : index
      %67 = vector.load %arg15[%c0_42, %c0_43] : memref<128x128xbf16, #tpu.memory_space<vmem>>, vector<128x128xbf16>
      %cst_44 = arith.constant dense<0.000000e+00> : vector<8x128xf32>
      %68 = tpu.matmul %66, %67, %cst_44 {dimension_numbers = #tpu.dot_dimension_numbers<[1], [0], [0], [1], [0, 0, 1, 1], [], []>} : vector<8x128xbf16>, vector<128x128xbf16>, vector<8x128xf32> -> vector<8x128xf32>
      %69 = arith.truncf %68 : vector<8x128xf32> to vector<8x128xbf16>
      %c0_45 = arith.constant 0 : index
      %c0_46 = arith.constant 0 : index
      %70 = vector.load %arg7[%c0_45, %c0_46] : memref<128x128xbf16, #tpu.memory_space<vmem>>, vector<128x128xbf16>
      %cst_47 = arith.constant dense<0.000000e+00> : vector<8x128xf32>
      %71 = tpu.matmul %69, %70, %cst_47 {dimension_numbers = #tpu.dot_dimension_numbers<[1], [0], [0], [1], [0, 0, 1, 1], [], []>} : vector<8x128xbf16>, vector<128x128xbf16>, vector<8x128xf32> -> vector<8x128xf32>
      %c0_48 = arith.constant 0 : index
      %c0_49 = arith.constant 0 : index
      %72 = vector.load %arg8[%c0_48, %c0_49] : memref<1x128xf32, #tpu.memory_space<vmem>>, vector<1x128xf32>
      %73 = vector.broadcast %72 : vector<1x128xf32> to vector<8x128xf32>
      %74 = arith.addf %71, %73 : vector<8x128xf32>
      %cst_50 = arith.constant 0.000000e+00 : f32
      %75 = vector.broadcast %cst_50 : f32 to vector<8x128xf32>
      %76 = arith.cmpf ogt, %74, %75 : vector<8x128xf32>
      %cst_51 = arith.constant 1.000000e-01 : f32
      %77 = vector.broadcast %cst_51 : f32 to vector<8x128xf32>
      %78 = arith.mulf %77, %74 : vector<8x128xf32>
      %79 = arith.select %76, %74, %78 : vector<8x128xi1>, vector<8x128xf32>
      %80 = arith.truncf %79 : vector<8x128xf32> to vector<8x128xbf16>
      %c0_52 = arith.constant 0 : index
      %c0_53 = arith.constant 0 : index
      %81 = vector.load %arg9[%c0_52, %c0_53] : memref<128x128xbf16, #tpu.memory_space<vmem>>, vector<128x128xbf16>
      %cst_54 = arith.constant dense<0.000000e+00> : vector<8x128xf32>
      %82 = tpu.matmul %80, %81, %cst_54 {dimension_numbers = #tpu.dot_dimension_numbers<[1], [0], [0], [1], [0, 0, 1, 1], [], []>} : vector<8x128xbf16>, vector<128x128xbf16>, vector<8x128xf32> -> vector<8x128xf32>
      %c0_55 = arith.constant 0 : index
      %c0_56 = arith.constant 0 : index
      %83 = vector.load %arg10[%c0_55, %c0_56] : memref<1x128xf32, #tpu.memory_space<vmem>>, vector<1x128xf32>
      %84 = vector.broadcast %83 : vector<1x128xf32> to vector<8x128xf32>
      %85 = arith.addf %82, %84 : vector<8x128xf32>
      %c0_57 = arith.constant 0 : index
      %c0_58 = arith.constant 0 : index
      %86 = vector.load %arg11[%c0_57, %c0_58] : memref<8x128xf32, #tpu.memory_space<vmem>>, vector<8x128xf32>
      %87 = tpu.concatenate %86, %85 in 1 : vector<8x128xf32>, vector<8x128xf32> -> vector<8x256xf32>
      %c0_59 = arith.constant 0 : index
      %c0_60 = arith.constant 0 : index
      %88 = vector.load %arg12[%c0_59, %c0_60] : memref<256x128xf32, #tpu.memory_space<vmem>>, vector<256x128xf32>
      %cst_61 = arith.constant dense<0.000000e+00> : vector<8x128xf32>
      %89 = tpu.matmul %87, %88, %cst_61 {dimension_numbers = #tpu.dot_dimension_numbers<[1], [0], [0], [1], [0, 0, 1, 1], [], []>} : vector<8x256xf32>, vector<256x128xf32>, vector<8x128xf32> -> vector<8x128xf32>
      %c0_62 = arith.constant 0 : index
      %c0_63 = arith.constant 0 : index
      %90 = vector.load %arg13[%c0_62, %c0_63] : memref<1x128xf32, #tpu.memory_space<vmem>>, vector<1x128xf32>
      %91 = vector.broadcast %90 : vector<1x128xf32> to vector<8x128xf32>
      %92 = arith.addf %89, %91 : vector<8x128xf32>
      %c0_64 = arith.constant 0 : index
      %c0_65 = arith.constant 0 : index
      %93 = vector.load %arg14[%c0_64, %c0_65] : memref<8x128xf32, #tpu.memory_space<vmem>>, vector<8x128xf32>
      tpu.vector_store %arg14[%c0_64, %c0_65], %92 {strides = array<i32>} : memref<8x128xf32, #tpu.memory_space<vmem>>, vector<8x128xf32>,
    } else {
    }
    return
  }
  func.func @transform_0(%arg0: i32, %arg1: memref<8xi32, #tpu.memory_space<smem>>) -> (i32, i32) {
    %c0_i32 = arith.constant 0 : i32
    %c0_i32_0 = arith.constant 0 : i32
    return %arg0, %c0_i32 : i32, i32
  }
  func.func @transform_2(%arg0: i32, %arg1: memref<8xi32, #tpu.memory_space<smem>>) -> (i32, i32) {
    %c0_i32 = arith.constant 0 : i32
    %c0_i32_0 = arith.constant 0 : i32
    %c0_i32_1 = arith.constant 0 : i32
    return %c0_i32, %c0_i32_0 : i32, i32
  }
  func.func @transform_3(%arg0: i32, %arg1: memref<8xi32, #tpu.memory_space<smem>>) -> (i32, i32) {
    %c0_i32 = arith.constant 0 : i32
    %c0_i32_0 = arith.constant 0 : i32
    %c0_i32_1 = arith.constant 0 : i32
    return %c0_i32, %c0_i32_0 : i32, i32
  }
  func.func @transform_4(%arg0: i32, %arg1: memref<8xi32, #tpu.memory_space<smem>>) -> (i32, i32) {
    %c0_i32 = arith.constant 0 : i32
    %c0_i32_0 = arith.constant 0 : i32
    %c0_i32_1 = arith.constant 0 : i32
    return %c0_i32, %c0_i32_0 : i32, i32
  }
  func.func @transform_5(%arg0: i32, %arg1: memref<8xi32, #tpu.memory_space<smem>>) -> (i32, i32) {
    %c0_i32 = arith.constant 0 : i32
    %c0_i32_0 = arith.constant 0 : i32
    %c0_i32_1 = arith.constant 0 : i32
    return %c0_i32, %c0_i32_0 : i32, i32
  }
  func.func @transform_6(%arg0: i32, %arg1: memref<8xi32, #tpu.memory_space<smem>>) -> (i32, i32) {
    %c0_i32 = arith.constant 0 : i32
    %c0_i32_0 = arith.constant 0 : i32
    %c0_i32_1 = arith.constant 0 : i32
    return %c0_i32, %c0_i32_0 : i32, i32
  }
  func.func @transform_7(%arg0: i32, %arg1: memref<8xi32, #tpu.memory_space<smem>>) -> (i32, i32) {
    %c0_i32 = arith.constant 0 : i32
    %c0_i32_0 = arith.constant 0 : i32
    %c0_i32_1 = arith.constant 0 : i32
    return %c0_i32, %c0_i32_0 : i32, i32
  }
  func.func @transform_8(%arg0: i32, %arg1: memref<8xi32, #tpu.memory_space<smem>>) -> (i32, i32) {
    %c0_i32 = arith.constant 0 : i32
    %c0_i32_0 = arith.constant 0 : i32
    %c0_i32_1 = arith.constant 0 : i32
    return %c0_i32, %c0_i32_0 : i32, i32
  }
  func.func @transform_9(%arg0: i32, %arg1: memref<8xi32, #tpu.memory_space<smem>>) -> (i32, i32) {
    %c0_i32 = arith.constant 0 : i32
    %c0_i32_0 = arith.constant 0 : i32
    %c0_i32_1 = arith.constant 0 : i32
    return %c0_i32, %c0_i32_0 : i32, i32
  }
  func.func @transform_10(%arg0: i32, %arg1: memref<8xi32, #tpu.memory_space<smem>>) -> (i32, i32) {
    %c0_i32 = arith.constant 0 : i32
    %c0_i32_0 = arith.constant 0 : i32
    %c0_i32_1 = arith.constant 0 : i32
    return %c0_i32, %c0_i32_0 : i32, i32
  }
  func.func @transform_11(%arg0: i32, %arg1: memref<8xi32, #tpu.memory_space<smem>>) -> (i32, i32) {
    %c0_i32 = arith.constant 0 : i32
    %c0_i32_0 = arith.constant 0 : i32
    %c0_i32_1 = arith.constant 0 : i32
    return %c0_i32, %c0_i32_0 : i32, i32
  }
  func.func @transform_12(%arg0: i32, %arg1: memref<8xi32, #tpu.memory_space<smem>>) -> (i32, i32) {
    %c0_i32 = arith.constant 0 : i32
    %c0_i32_0 = arith.constant 0 : i32
    %c0_i32_1 = arith.constant 0 : i32
    return %c0_i32, %c0_i32_0 : i32, i32
  }
}

</mosaic_0001>

<llo_original>
// kernel: subsequent_attribute_predictor_forward.1
$region0: #{subsequent_attribute_predictor_forward.1}
  #allocation0 [shape = 'u32[]', space=smem, size = 0x4, offset = 0x4, fixed_abs, tag = 'smem constant byte address 0x4 - core index']
  #allocation1 [shape = 'u32[72,128]{1,0:T(1,128)}', space=vmem, size = 0x9000, scoped, tag = 'internal scratch']
  #allocation2 [shape = 'bf16[128,128]{1,0:T(8,128)(2,1)}', space=vmem, size = 0x8000, scoped, tag = 'scratch operand']
  #allocation3 [shape = 'f32[8,128]{1,0:T(8,128)}', space=vmem, size = 0x1000, scoped, tag = 'scratch operand']
  #allocation4 [shape = 's32[8]{0}', space=sflag, size = 0x20, scoped, tag = 'scratch operand']
  #allocation5 [shape = 's32[1]{0}', space=sflag, size = 0x4, scoped, tag = 'scoped memory for subsequent_attribute_predictor_forward.1']
  #allocation6 [shape = 'u8[512]{0}', space=smem, size = 0x200, scoped, tag = 'prefetched SMEM operand 0']
  #allocation19 [shape = 's32[]', space=sflag, size = 0x4, offset = 0, fixed_abs, tag = 'sflag constant byte address 0x0 - dummy sync flag']
  #allocation20 [shape = 's32[]', space=sflag, size = 0x4, offset = 0, fixed_abs, tag = 'sflag constant byte address 0x0 - dummy sync flag']
  #allocation21 [shape = 's32[]', space=sflag, size = 0x4, offset = 0, fixed_abs, tag = 'sflag constant byte address 0x0 - dummy sync flag']
  #allocation22 [shape = 's32[]', space=sflag, size = 0x4, offset = 0, fixed_abs, tag = 'sflag constant byte address 0x0 - dummy sync flag']
  #allocation23 [shape = 's32[]', space=sflag, size = 0x4, offset = 0, fixed_abs, tag = 'sflag constant byte address 0x0 - dummy sync flag']
  #allocation24 [shape = 's32[]', space=sflag, size = 0x4, offset = 0, fixed_abs, tag = 'sflag constant byte address 0x0 - dummy sync flag']
  #allocation25 [shape = 's32[]', space=sflag, size = 0x4, offset = 0, fixed_abs, tag = 'sflag constant byte address 0x0 - dummy sync flag']
  #allocation26 [shape = 's32[]', space=sflag, size = 0x4, offset = 0, fixed_abs, tag = 'sflag constant byte address 0x0 - dummy sync flag']
  %s0 = inlined_call_operand.vmem [shape: s32[8], index: 0, kind: input, shape index: {}]
  %s1 = inlined_call_operand.vmem [shape: bf16[128,128], index: 1, kind: input, shape index: {}]
  %s2 = inlined_call_operand.vmem [shape: f32[128,128], index: 2, kind: input, shape index: {}]
  %s3 = inlined_call_operand.vmem [shape: bf16[128,128], index: 3, kind: input, shape index: {}]
  %s4 = inlined_call_operand.hbm [shape: bf16[128,128], index: 4, kind: input, shape index: {}]
  %s5 = inlined_call_operand.vmem [shape: f32[1,128], index: 5, kind: input, shape index: {}]
  %s6 = inlined_call_operand.hbm [shape: bf16[128,128], index: 6, kind: input, shape index: {}]
  %s7 = inlined_call_operand.hbm [shape: f32[1,128], index: 7, kind: input, shape index: {}]
  %s8 = inlined_call_operand.hbm [shape: bf16[128,128], index: 8, kind: input, shape index: {}]
  %s9 = inlined_call_operand.hbm [shape: f32[1,128], index: 9, kind: input, shape index: {}]
  %s10 = inlined_call_operand.vmem [shape: f32[8,128], index: 10, kind: input, shape index: {}]
  %s11 = inlined_call_operand.vmem [shape: f32[256,128], index: 11, kind: input, shape index: {}]
  %s12 = inlined_call_operand.hbm [shape: f32[1,128], index: 12, kind: input, shape index: {}]
  %s13 = inlined_call_operand.hbm [shape: f32[8,128], index: 13, kind: output, shape index: {}]
  %s14 = sld [smem:[#allocation0]]
  $region326: #{subsequent_attribute_predictor_forward.1} parent=0
    _
  %s16 = ssub.s32 1, %s14
  %s17 = scalar_select 0, %s16, %s14
  %s19 = sshll.u32 %s0, 4
  %s20 = int_to_ptr.vmem [resolvable:$true] %s19
  %22 = dma.vmem_to_smem %s20, 16, [#allocation6], [#allocation5]
  %24 = dma.done [#allocation5], 16
  %25 = sfence
  $region1: #{subsequent_attribute_predictor_forward.1} parent=0
    #allocation7 [shape = 'u8[32768]{0}', space=vmem, size = 0x8000, scoped, tag = 'input window, operand 4, single buffered']
    #allocation8 [shape = 's32[1]{0}', space=sflag, size = 0x4, scoped, tag = 'scoped memory for subsequent_attribute_predictor_forward.1']
    #allocation9 [shape = 's32[1]{0}', space=sflag, size = 0x4, scoped, tag = 'scoped memory for subsequent_attribute_predictor_forward.1']
    #allocation10 [shape = 'u8[32768]{0}', space=vmem, size = 0x8000, scoped, tag = 'input window, operand 6, single buffered']
    #allocation11 [shape = 's32[1]{0}', space=sflag, size = 0x4, scoped, tag = 'scoped memory for subsequent_attribute_predictor_forward.1']
    #allocation12 [shape = 'u8[512]{0}', space=vmem, size = 0x400, scoped, tag = 'input window, operand 7, single buffered']
    #allocation13 [shape = 'u8[32768]{0}', space=vmem, size = 0x8000, scoped, tag = 'input window, operand 8, single buffered']
    #allocation14 [shape = 's32[1]{0}', space=sflag, size = 0x4, scoped, tag = 'scoped memory for subsequent_attribute_predictor_forward.1']
    #allocation15 [shape = 'u8[512]{0}', space=vmem, size = 0x400, scoped, tag = 'input window, operand 9, single buffered']
    #allocation16 [shape = 'u8[512]{0}', space=vmem, size = 0x400, scoped, tag = 'input window, operand 12, single buffered']
    #allocation17 [shape = 's32[1]{0}', space=sflag, size = 0x4, scoped, tag = 'scoped memory for subsequent_attribute_predictor_forward.1']
    #allocation18 [shape = 'u8[4096]{0}', space=vmem, size = 0x1000, scoped, tag = 'output window, operand 0, single buffered']
    %26 = vsyncpa [#allocation8], 0
    %27 = vsyncpa [#allocation11], 0
    %28 = vsyncpa [#allocation14], 0
    %29 = vsyncpa [#allocation17], 0
    %30 = vsyncpa [#allocation9], 0
    // Predicated region
    $region2: #{subsequent_attribute_predictor_forward.1} parent=1 // pred_check
      _
    $region3: #{subsequent_attribute_predictor_forward.1} parent=1 // pred_check_branch
      %32 = sbr.rel (0) target = $region5
    $region4: #{subsequent_attribute_predictor_forward.1} parent=1 // pred_region
      _
    $region5: #{subsequent_attribute_predictor_forward.1} parent=1 // pred_fallthru
      _
    // Predicated region
    $region6: #{subsequent_attribute_predictor_forward.1} parent=1 // pred_check
      _
    $region7: #{subsequent_attribute_predictor_forward.1} parent=1 // pred_check_branch
      %34 = sbr.rel (0) target = $region9
    $region8: #{subsequent_attribute_predictor_forward.1} parent=1 // pred_region
      _
    $region9: #{subsequent_attribute_predictor_forward.1} parent=1 // pred_fallthru
      _
    // Predicated region
    $region10: #{subsequent_attribute_predictor_forward.1} parent=1 // pred_check
      _
    $region11: #{subsequent_attribute_predictor_forward.1} parent=1 // pred_check_branch
      %36 = sbr.rel (0) target = $region13
    $region12: #{subsequent_attribute_predictor_forward.1} parent=1 // pred_region
      %38 = vsyncadd [#allocation8], 0
      %s39 = sshll.u32 %s4, 4
      %s40 = int_to_ptr.hbm [resolvable:$true] %s39
      %s41 = sshll.u32 [#allocation7], 4
      %s42 = int_to_ptr.vmem [resolvable:$true] %s41
      %47 = dma.hbm_to_vmem [thread:$0]  %s40, 1024, %s42, [#allocation8], 64, 64, 4
    $region13: #{subsequent_attribute_predictor_forward.1} parent=1 // pred_fallthru
      _
    // Predicated region
    $region14: #{subsequent_attribute_predictor_forward.1} parent=1 // pred_check
      _
    $region15: #{subsequent_attribute_predictor_forward.1} parent=1 // pred_check_branch
      %49 = sbr.rel (0) target = $region17
    $region16: #{subsequent_attribute_predictor_forward.1} parent=1 // pred_region
      _
    $region17: #{subsequent_attribute_predictor_forward.1} parent=1 // pred_fallthru
      _
    // Predicated region
    $region18: #{subsequent_attribute_predictor_forward.1} parent=1 // pred_check
      _
    $region19: #{subsequent_attribute_predictor_forward.1} parent=1 // pred_check_branch
      %51 = sbr.rel (0) target = $region21
    $region20: #{subsequent_attribute_predictor_forward.1} parent=1 // pred_region
      %53 = vsyncadd [#allocation11], 0
      %s54 = sshll.u32 %s6, 4
      %s55 = int_to_ptr.hbm [resolvable:$true] %s54
      %s56 = sshll.u32 [#allocation10], 4
      %s57 = int_to_ptr.vmem [resolvable:$true] %s56
      %62 = dma.hbm_to_vmem [thread:$0]  %s55, 1024, %s57, [#allocation11], 64, 64, 4
    $region21: #{subsequent_attribute_predictor_forward.1} parent=1 // pred_fallthru
      _
    // Predicated region
    $region22: #{subsequent_attribute_predictor_forward.1} parent=1 // pred_check
      _
    $region23: #{subsequent_attribute_predictor_forward.1} parent=1 // pred_check_branch
      %64 = sbr.rel (0) target = $region25
    $region24: #{subsequent_attribute_predictor_forward.1} parent=1 // pred_region
      %66 = vsyncadd [#allocation11], 0
      %s68 = sshll.u32 %s7, 4
      %s69 = int_to_ptr.hbm [resolvable:$true] %s68
      %s70 = sshll.u32 [#allocation12], 4
      %s71 = int_to_ptr.vmem [resolvable:$true] %s70
      %73 = dma.hbm_to_vmem [thread:$0]  %s69, 16, %s71, [#allocation11]
    $region25: #{subsequent_attribute_predictor_forward.1} parent=1 // pred_fallthru
      _
    // Predicated region
    $region26: #{subsequent_attribute_predictor_forward.1} parent=1 // pred_check
      _
    $region27: #{subsequent_attribute_predictor_forward.1} parent=1 // pred_check_branch
      %75 = sbr.rel (0) target = $region29
    $region28: #{subsequent_attribute_predictor_forward.1} parent=1 // pred_region
      %77 = vsyncadd [#allocation14], 0
      %s78 = sshll.u32 %s8, 4
      %s79 = int_to_ptr.hbm [resolvable:$true] %s78
      %s80 = sshll.u32 [#allocation13], 4
      %s81 = int_to_ptr.vmem [resolvable:$true] %s80
      %86 = dma.hbm_to_vmem [thread:$0]  %s79, 1024, %s81, [#allocation14], 64, 64, 4
    $region29: #{subsequent_attribute_predictor_forward.1} parent=1 // pred_fallthru
      _
    // Predicated region
    $region30: #{subsequent_attribute_predictor_forward.1} parent=1 // pred_check
      _
    $region31: #{subsequent_attribute_predictor_forward.1} parent=1 // pred_check_branch
      %88 = sbr.rel (0) target = $region33
    $region32: #{subsequent_attribute_predictor_forward.1} parent=1 // pred_region
      %90 = vsyncadd [#allocation14], 0
      %s92 = sshll.u32 %s9, 4
      %s93 = int_to_ptr.hbm [resolvable:$true] %s92
      %s94 = sshll.u32 [#allocation15], 4
      %s95 = int_to_ptr.vmem [resolvable:$true] %s94
      %97 = dma.hbm_to_vmem [thread:$0]  %s93, 16, %s95, [#allocation14]
    $region33: #{subsequent_attribute_predictor_forward.1} parent=1 // pred_fallthru
      _
    // Predicated region
    $region34: #{subsequent_attribute_predictor_forward.1} parent=1 // pred_check
      _
    $region35: #{subsequent_attribute_predictor_forward.1} parent=1 // pred_check_branch
      %99 = sbr.rel (0) target = $region37
    $region36: #{subsequent_attribute_predictor_forward.1} parent=1 // pred_region
      _
    $region37: #{subsequent_attribute_predictor_forward.1} parent=1 // pred_fallthru
      _
    // Predicated region
    $region38: #{subsequent_attribute_predictor_forward.1} parent=1 // pred_check
      _
    $region39: #{subsequent_attribute_predictor_forward.1} parent=1 // pred_check_branch
      %101 = sbr.rel (0) target = $region41
    $region40: #{subsequent_attribute_predictor_forward.1} parent=1 // pred_region
      _
    $region41: #{subsequent_attribute_predictor_forward.1} parent=1 // pred_fallthru
      _
    // Predicated region
    $region42: #{subsequent_attribute_predictor_forward.1} parent=1 // pred_check
      _
    $region43: #{subsequent_attribute_predictor_forward.1} parent=1 // pred_check_branch
      %103 = sbr.rel (0) target = $region45
    $region44: #{subsequent_attribute_predictor_forward.1} parent=1 // pred_region
      %105 = vsyncadd [#allocation17], 0
      %s107 = sshll.u32 %s12, 4
      %s108 = int_to_ptr.hbm [resolvable:$true] %s107
      %s109 = sshll.u32 [#allocation16], 4
      %s110 = int_to_ptr.vmem [resolvable:$true] %s109
      %112 = dma.hbm_to_vmem [thread:$0]  %s108, 16, %s110, [#allocation17]
    $region45: #{subsequent_attribute_predictor_forward.1} parent=1 // pred_fallthru
      _
    // Predicated region
    $region46: #{subsequent_attribute_predictor_forward.1} parent=1 // pred_check
      _
    $region47: #{subsequent_attribute_predictor_forward.1} parent=1 // pred_check_branch
      %114 = sbr.rel (0) target = $region49
    $region48: #{subsequent_attribute_predictor_forward.1} parent=1 // pred_region
      %116 = dma.done [#allocation8], 1024
    $region49: #{subsequent_attribute_predictor_forward.1} parent=1 // pred_fallthru
      _
    // Predicated region
    $region50: #{subsequent_attribute_predictor_forward.1} parent=1 // pred_check
      _
    $region51: #{subsequent_attribute_predictor_forward.1} parent=1 // pred_check_branch
      %118 = sbr.rel (0) target = $region53
    $region52: #{subsequent_attribute_predictor_forward.1} parent=1 // pred_region
      %120 = dma.done [#allocation11], 1024
    $region53: #{subsequent_attribute_predictor_forward.1} parent=1 // pred_fallthru
      _
    // Predicated region
    $region54: #{subsequent_attribute_predictor_forward.1} parent=1 // pred_check
      _
    $region55: #{subsequent_attribute_predictor_forward.1} parent=1 // pred_check_branch
      %122 = sbr.rel (0) target = $region57
    $region56: #{subsequent_attribute_predictor_forward.1} parent=1 // pred_region
      %124 = dma.done [#allocation11], 16
    $region57: #{subsequent_attribute_predictor_forward.1} parent=1 // pred_fallthru
      _
    // Predicated region
    $region58: #{subsequent_attribute_predictor_forward.1} parent=1 // pred_check
      _
    $region59: #{subsequent_attribute_predictor_forward.1} parent=1 // pred_check_branch
      %126 = sbr.rel (0) target = $region61
    $region60: #{subsequent_attribute_predictor_forward.1} parent=1 // pred_region
      %128 = dma.done [#allocation14], 1024
    $region61: #{subsequent_attribute_predictor_forward.1} parent=1 // pred_fallthru
      _
    // Predicated region
    $region62: #{subsequent_attribute_predictor_forward.1} parent=1 // pred_check
      _
    $region63: #{subsequent_attribute_predictor_forward.1} parent=1 // pred_check_branch
      %130 = sbr.rel (0) target = $region65
    $region64: #{subsequent_attribute_predictor_forward.1} parent=1 // pred_region
      %132 = dma.done [#allocation14], 16
    $region65: #{subsequent_attribute_predictor_forward.1} parent=1 // pred_fallthru
      _
    // Predicated region
    $region66: #{subsequent_attribute_predictor_forward.1} parent=1 // pred_check
      _
    $region67: #{subsequent_attribute_predictor_forward.1} parent=1 // pred_check_branch
      %134 = sbr.rel (0) target = $region69
    $region68: #{subsequent_attribute_predictor_forward.1} parent=1 // pred_region
      %136 = dma.done [#allocation17], 16
    $region69: #{subsequent_attribute_predictor_forward.1} parent=1 // pred_fallthru
      _
    %p137 = scmp.eq.s32.totalorder 0, 0
    // Predicated region
    $region70: #{subsequent_attribute_predictor_forward.1} parent=1 // pred_check
      %p138 = pneg %p137
    $region71: #{subsequent_attribute_predictor_forward.1} parent=1 // pred_check_branch
      %140 = sbr.rel (%p138) target = $region73
    $region72: #{subsequent_attribute_predictor_forward.1} parent=1 // pred_region
      %s141 = sld [smem:[#allocation6]]
      %s142 = scalar_lea.vmem %s2, %s141
      // Predicated region
      $region74: #{subsequent_attribute_predictor_forward.1} parent=72 // pred_check
        _
      $region75: #{subsequent_attribute_predictor_forward.1} parent=72 // pred_check_branch
        %144 = sbr.rel target = $region77
      $region76: #{subsequent_attribute_predictor_forward.1} parent=72 // pred_region
        // Predicated region
        $region89: #{subsequent_attribute_predictor_forward.1} parent=76 // pred_check
          _
        $region90: #{subsequent_attribute_predictor_forward.1} parent=76 // pred_check_branch
          %160 = sbr.rel (0) target = $region92
        $region91: #{subsequent_attribute_predictor_forward.1} parent=76 // pred_region
          %s162 = ssub.s32 2, 1
          loop: start=0, step=1, limit=1
          $region93: #{subsequent_attribute_predictor_forward.1} parent=91 // loop_pre_header
            _
          $region94: #{subsequent_attribute_predictor_forward.1} parent=91 // loop_header
            %s164 = sphi 0, %s168
            %p165 = scmp.ge.s32.totalorder %s164, 1
            %s169 = sphi %s142, %s142
            %s170 = sphi [#allocation3], [#allocation3]
          $region95: #{subsequent_attribute_predictor_forward.1} parent=91 // loop_header_branch
            %167 = sbr.rel (%p165) target = $region99
          $region96: #{subsequent_attribute_predictor_forward.1} parent=91 // loop_body
            %v171 = vld [vmem:[%s169] sm:%s162]
            %172 = vst [vmem:[%s170] sm:%s162] %v171
          $region97: #{subsequent_attribute_predictor_forward.1} parent=91 // loop_footer
            %s168 = sadd.s32 1, %s164
          $region98: #{subsequent_attribute_predictor_forward.1} parent=91 // loop_footer_branch
            %163 = sbr.rel target = $region94
          $region99: #{subsequent_attribute_predictor_forward.1} parent=91 // loop_exit
            _
        $region92: #{subsequent_attribute_predictor_forward.1} parent=76 // pred_fallthru
          _
      $region77: #{subsequent_attribute_predictor_forward.1} parent=72 // pred_fallthru
        _
      // Predicated region
      $region78: #{subsequent_attribute_predictor_forward.1} parent=72 // pred_check
        _
      $region79: #{subsequent_attribute_predictor_forward.1} parent=72 // pred_check_branch
        %146 = sbr.rel (0) target = $region81
      $region80: #{subsequent_attribute_predictor_forward.1} parent=72 // pred_region
        %s148 = ssub.s32 2, 1
        loop: start=0, step=1, limit=1
        $region82: #{subsequent_attribute_predictor_forward.1} parent=80 // loop_pre_header
          _
        $region83: #{subsequent_attribute_predictor_forward.1} parent=80 // loop_header
          %s150 = sphi 0, %s154
          %p151 = scmp.ge.s32.totalorder %s150, 1
          %s155 = sphi %s142, %s142
          %s156 = sphi [#allocation3], [#allocation3]
        $region84: #{subsequent_attribute_predictor_forward.1} parent=80 // loop_header_branch
          %153 = sbr.rel (%p151) target = $region88
        $region85: #{subsequent_attribute_predictor_forward.1} parent=80 // loop_body
          %v157 = vld [vmem:[%s155] sm:%s148]
          %158 = vst [vmem:[%s156] sm:%s148] %v157
        $region86: #{subsequent_attribute_predictor_forward.1} parent=80 // loop_footer
          %s154 = sadd.s32 1, %s150
        $region87: #{subsequent_attribute_predictor_forward.1} parent=80 // loop_footer_branch
          %149 = sbr.rel target = $region83
        $region88: #{subsequent_attribute_predictor_forward.1} parent=80 // loop_exit
          _
      $region81: #{subsequent_attribute_predictor_forward.1} parent=72 // pred_fallthru
        _
      // Predicated region
      $region100: #{subsequent_attribute_predictor_forward.1} parent=72 // pred_check
        _
      $region101: #{subsequent_attribute_predictor_forward.1} parent=72 // pred_check_branch
        %175 = sbr.rel (0) target = $region103
      $region102: #{subsequent_attribute_predictor_forward.1} parent=72 // pred_region
        %176 = vsyncadd [#allocation4], 16
      $region103: #{subsequent_attribute_predictor_forward.1} parent=72 // pred_fallthru
        _
      %s177 = sld [smem:[#allocation6 + $0x1]]
      %s178 = scalar_lea.vmem %s2, %s177
      %s179 = scalar_lea.vmem [#allocation3], 1
      %s180 = scalar_lea.sflag [#allocation4], 1
      // Predicated region
      $region104: #{subsequent_attribute_predictor_forward.1} parent=72 // pred_check
        _
      $region105: #{subsequent_attribute_predictor_forward.1} parent=72 // pred_check_branch
        %182 = sbr.rel target = $region107
      $region106: #{subsequent_attribute_predictor_forward.1} parent=72 // pred_region
        // Predicated region
        $region119: #{subsequent_attribute_predictor_forward.1} parent=106 // pred_check
          _
        $region120: #{subsequent_attribute_predictor_forward.1} parent=106 // pred_check_branch
          %198 = sbr.rel (0) target = $region122
        $region121: #{subsequent_attribute_predictor_forward.1} parent=106 // pred_region
          %s200 = ssub.s32 2, 1
          loop: start=0, step=1, limit=1
          $region123: #{subsequent_attribute_predictor_forward.1} parent=121 // loop_pre_header
            _
          $region124: #{subsequent_attribute_predictor_forward.1} parent=121 // loop_header
            %s202 = sphi 0, %s206
            %p203 = scmp.ge.s32.totalorder %s202, 1
            %s207 = sphi %s178, %s178
            %s208 = sphi %s179, %s179
          $region125: #{subsequent_attribute_predictor_forward.1} parent=121 // loop_header_branch
            %205 = sbr.rel (%p203) target = $region129
          $region126: #{subsequent_attribute_predictor_forward.1} parent=121 // loop_body
            %v209 = vld [vmem:[%s207] sm:%s200]
            %210 = vst [vmem:[%s208] sm:%s200] %v209
          $region127: #{subsequent_attribute_predictor_forward.1} parent=121 // loop_footer
            %s206 = sadd.s32 1, %s202
          $region128: #{subsequent_attribute_predictor_forward.1} parent=121 // loop_footer_branch
            %201 = sbr.rel target = $region124
          $region129: #{subsequent_attribute_predictor_forward.1} parent=121 // loop_exit
            _
        $region122: #{subsequent_attribute_predictor_forward.1} parent=106 // pred_fallthru
          _
      $region107: #{subsequent_attribute_predictor_forward.1} parent=72 // pred_fallthru
        _
      // Predicated region
      $region108: #{subsequent_attribute_predictor_forward.1} parent=72 // pred_check
        _
      $region109: #{subsequent_attribute_predictor_forward.1} parent=72 // pred_check_branch
        %184 = sbr.rel (0) target = $region111
      $region110: #{subsequent_attribute_predictor_forward.1} parent=72 // pred_region
        %s186 = ssub.s32 2, 1
        loop: start=0, step=1, limit=1
        $region112: #{subsequent_attribute_predictor_forward.1} parent=110 // loop_pre_header
          _
        $region113: #{subsequent_attribute_predictor_forward.1} parent=110 // loop_header
          %s188 = sphi 0, %s192
          %p189 = scmp.ge.s32.totalorder %s188, 1
          %s193 = sphi %s178, %s178
          %s194 = sphi %s179, %s179
        $region114: #{subsequent_attribute_predictor_forward.1} parent=110 // loop_header_branch
          %191 = sbr.rel (%p189) target = $region118
        $region115: #{subsequent_attribute_predictor_forward.1} parent=110 // loop_body
          %v195 = vld [vmem:[%s193] sm:%s186]
          %196 = vst [vmem:[%s194] sm:%s186] %v195
        $region116: #{subsequent_attribute_predictor_forward.1} parent=110 // loop_footer
          %s192 = sadd.s32 1, %s188
        $region117: #{subsequent_attribute_predictor_forward.1} parent=110 // loop_footer_branch
          %187 = sbr.rel target = $region113
        $region118: #{subsequent_attribute_predictor_forward.1} parent=110 // loop_exit
          _
      $region111: #{subsequent_attribute_predictor_forward.1} parent=72 // pred_fallthru
        _
      // Predicated region
      $region130: #{subsequent_attribute_predictor_forward.1} parent=72 // pred_check
        _
      $region131: #{subsequent_attribute_predictor_forward.1} parent=72 // pred_check_branch
        %213 = sbr.rel (0) target = $region133
      $region132: #{subsequent_attribute_predictor_forward.1} parent=72 // pred_region
        %214 = vsyncadd %s180, 16
      $region133: #{subsequent_attribute_predictor_forward.1} parent=72 // pred_fallthru
        _
      %s215 = sld [smem:[#allocation6 + $0x2]]
      %s216 = scalar_lea.vmem %s2, %s215
      %s217 = scalar_lea.vmem [#allocation3], 2
      %s218 = scalar_lea.sflag [#allocation4], 2
      // Predicated region
      $region134: #{subsequent_attribute_predictor_forward.1} parent=72 // pred_check
        _
      $region135: #{subsequent_attribute_predictor_forward.1} parent=72 // pred_check_branch
        %220 = sbr.rel target = $region137
      $region136: #{subsequent_attribute_predictor_forward.1} parent=72 // pred_region
        // Predicated region
        $region149: #{subsequent_attribute_predictor_forward.1} parent=136 // pred_check
          _
        $region150: #{subsequent_attribute_predictor_forward.1} parent=136 // pred_check_branch
          %236 = sbr.rel (0) target = $region152
        $region151: #{subsequent_attribute_predictor_forward.1} parent=136 // pred_region
          %s238 = ssub.s32 2, 1
          loop: start=0, step=1, limit=1
          $region153: #{subsequent_attribute_predictor_forward.1} parent=151 // loop_pre_header
            _
          $region154: #{subsequent_attribute_predictor_forward.1} parent=151 // loop_header
            %s240 = sphi 0, %s244
            %p241 = scmp.ge.s32.totalorder %s240, 1
            %s245 = sphi %s216, %s216
            %s246 = sphi %s217, %s217
          $region155: #{subsequent_attribute_predictor_forward.1} parent=151 // loop_header_branch
            %243 = sbr.rel (%p241) target = $region159
          $region156: #{subsequent_attribute_predictor_forward.1} parent=151 // loop_body
            %v247 = vld [vmem:[%s245] sm:%s238]
            %248 = vst [vmem:[%s246] sm:%s238] %v247
          $region157: #{subsequent_attribute_predictor_forward.1} parent=151 // loop_footer
            %s244 = sadd.s32 1, %s240
          $region158: #{subsequent_attribute_predictor_forward.1} parent=151 // loop_footer_branch
            %239 = sbr.rel target = $region154
          $region159: #{subsequent_attribute_predictor_forward.1} parent=151 // loop_exit
            _
        $region152: #{subsequent_attribute_predictor_forward.1} parent=136 // pred_fallthru
          _
      $region137: #{subsequent_attribute_predictor_forward.1} parent=72 // pred_fallthru
        _
      // Predicated region
      $region138: #{subsequent_attribute_predictor_forward.1} parent=72 // pred_check
        _
      $region139: #{subsequent_attribute_predictor_forward.1} parent=72 // pred_check_branch
        %222 = sbr.rel (0) target = $region141
      $region140: #{subsequent_attribute_predictor_forward.1} parent=72 // pred_region
        %s224 = ssub.s32 2, 1
        loop: start=0, step=1, limit=1
        $region142: #{subsequent_attribute_predictor_forward.1} parent=140 // loop_pre_header
          _
        $region143: #{subsequent_attribute_predictor_forward.1} parent=140 // loop_header
          %s226 = sphi 0, %s230
          %p227 = scmp.ge.s32.totalorder %s226, 1
          %s231 = sphi %s216, %s216
          %s232 = sphi %s217, %s217
        $region144: #{subsequent_attribute_predictor_forward.1} parent=140 // loop_header_branch
          %229 = sbr.rel (%p227) target = $region148
        $region145: #{subsequent_attribute_predictor_forward.1} parent=140 // loop_body
          %v233 = vld [vmem:[%s231] sm:%s224]
          %234 = vst [vmem:[%s232] sm:%s224] %v233
        $region146: #{subsequent_attribute_predictor_forward.1} parent=140 // loop_footer
          %s230 = sadd.s32 1, %s226
        $region147: #{subsequent_attribute_predictor_forward.1} parent=140 // loop_footer_branch
          %225 = sbr.rel target = $region143
        $region148: #{subsequent_attribute_predictor_forward.1} parent=140 // loop_exit
          _
      $region141: #{subsequent_attribute_predictor_forward.1} parent=72 // pred_fallthru
        _
      // Predicated region
      $region160: #{subsequent_attribute_predictor_forward.1} parent=72 // pred_check
        _
      $region161: #{subsequent_attribute_predictor_forward.1} parent=72 // pred_check_branch
        %251 = sbr.rel (0) target = $region163
      $region162: #{subsequent_attribute_predictor_forward.1} parent=72 // pred_region
        %252 = vsyncadd %s218, 16
      $region163: #{subsequent_attribute_predictor_forward.1} parent=72 // pred_fallthru
        _
      %s253 = sld [smem:[#allocation6 + $0x3]]
      %s254 = scalar_lea.vmem %s2, %s253
      %s255 = scalar_lea.vmem [#allocation3], 3
      %s256 = scalar_lea.sflag [#allocation4], 3
      // Predicated region
      $region164: #{subsequent_attribute_predictor_forward.1} parent=72 // pred_check
        _
      $region165: #{subsequent_attribute_predictor_forward.1} parent=72 // pred_check_branch
        %258 = sbr.rel target = $region167
      $region166: #{subsequent_attribute_predictor_forward.1} parent=72 // pred_region
        // Predicated region
        $region179: #{subsequent_attribute_predictor_forward.1} parent=166 // pred_check
          _
        $region180: #{subsequent_attribute_predictor_forward.1} parent=166 // pred_check_branch
          %274 = sbr.rel (0) target = $region182
        $region181: #{subsequent_attribute_predictor_forward.1} parent=166 // pred_region
          %s276 = ssub.s32 2, 1
          loop: start=0, step=1, limit=1
          $region183: #{subsequent_attribute_predictor_forward.1} parent=181 // loop_pre_header
            _
          $region184: #{subsequent_attribute_predictor_forward.1} parent=181 // loop_header
            %s278 = sphi 0, %s282
            %p279 = scmp.ge.s32.totalorder %s278, 1
            %s283 = sphi %s254, %s254
            %s284 = sphi %s255, %s255
          $region185: #{subsequent_attribute_predictor_forward.1} parent=181 // loop_header_branch
            %281 = sbr.rel (%p279) target = $region189
          $region186: #{subsequent_attribute_predictor_forward.1} parent=181 // loop_body
            %v285 = vld [vmem:[%s283] sm:%s276]
            %286 = vst [vmem:[%s284] sm:%s276] %v285
          $region187: #{subsequent_attribute_predictor_forward.1} parent=181 // loop_footer
            %s282 = sadd.s32 1, %s278
          $region188: #{subsequent_attribute_predictor_forward.1} parent=181 // loop_footer_branch
            %277 = sbr.rel target = $region184
          $region189: #{subsequent_attribute_predictor_forward.1} parent=181 // loop_exit
            _
        $region182: #{subsequent_attribute_predictor_forward.1} parent=166 // pred_fallthru
          _
      $region167: #{subsequent_attribute_predictor_forward.1} parent=72 // pred_fallthru
        _
      // Predicated region
      $region168: #{subsequent_attribute_predictor_forward.1} parent=72 // pred_check
        _
      $region169: #{subsequent_attribute_predictor_forward.1} parent=72 // pred_check_branch
        %260 = sbr.rel (0) target = $region171
      $region170: #{subsequent_attribute_predictor_forward.1} parent=72 // pred_region
        %s262 = ssub.s32 2, 1
        loop: start=0, step=1, limit=1
        $region172: #{subsequent_attribute_predictor_forward.1} parent=170 // loop_pre_header
          _
        $region173: #{subsequent_attribute_predictor_forward.1} parent=170 // loop_header
          %s264 = sphi 0, %s268
          %p265 = scmp.ge.s32.totalorder %s264, 1
          %s269 = sphi %s254, %s254
          %s270 = sphi %s255, %s255
        $region174: #{subsequent_attribute_predictor_forward.1} parent=170 // loop_header_branch
          %267 = sbr.rel (%p265) target = $region178
        $region175: #{subsequent_attribute_predictor_forward.1} parent=170 // loop_body
          %v271 = vld [vmem:[%s269] sm:%s262]
          %272 = vst [vmem:[%s270] sm:%s262] %v271
        $region176: #{subsequent_attribute_predictor_forward.1} parent=170 // loop_footer
          %s268 = sadd.s32 1, %s264
        $region177: #{subsequent_attribute_predictor_forward.1} parent=170 // loop_footer_branch
          %263 = sbr.rel target = $region173
        $region178: #{subsequent_attribute_predictor_forward.1} parent=170 // loop_exit
          _
      $region171: #{subsequent_attribute_predictor_forward.1} parent=72 // pred_fallthru
        _
      // Predicated region
      $region190: #{subsequent_attribute_predictor_forward.1} parent=72 // pred_check
        _
      $region191: #{subsequent_attribute_predictor_forward.1} parent=72 // pred_check_branch
        %289 = sbr.rel (0) target = $region193
      $region192: #{subsequent_attribute_predictor_forward.1} parent=72 // pred_region
        %290 = vsyncadd %s256, 16
      $region193: #{subsequent_attribute_predictor_forward.1} parent=72 // pred_fallthru
        _
      %s291 = sld [smem:[#allocation6 + $0x4]]
      %s292 = scalar_lea.vmem %s2, %s291
      %s293 = scalar_lea.vmem [#allocation3], 4
      %s294 = scalar_lea.sflag [#allocation4], 4
      // Predicated region
      $region194: #{subsequent_attribute_predictor_forward.1} parent=72 // pred_check
        _
      $region195: #{subsequent_attribute_predictor_forward.1} parent=72 // pred_check_branch
        %296 = sbr.rel target = $region197
      $region196: #{subsequent_attribute_predictor_forward.1} parent=72 // pred_region
        // Predicated region
        $region209: #{subsequent_attribute_predictor_forward.1} parent=196 // pred_check
          _
        $region210: #{subsequent_attribute_predictor_forward.1} parent=196 // pred_check_branch
          %312 = sbr.rel (0) target = $region212
        $region211: #{subsequent_attribute_predictor_forward.1} parent=196 // pred_region
          %s314 = ssub.s32 2, 1
          loop: start=0, step=1, limit=1
          $region213: #{subsequent_attribute_predictor_forward.1} parent=211 // loop_pre_header
            _
          $region214: #{subsequent_attribute_predictor_forward.1} parent=211 // loop_header
            %s316 = sphi 0, %s320
            %p317 = scmp.ge.s32.totalorder %s316, 1
            %s321 = sphi %s292, %s292
            %s322 = sphi %s293, %s293
          $region215: #{subsequent_attribute_predictor_forward.1} parent=211 // loop_header_branch
            %319 = sbr.rel (%p317) target = $region219
          $region216: #{subsequent_attribute_predictor_forward.1} parent=211 // loop_body
            %v323 = vld [vmem:[%s321] sm:%s314]
            %324 = vst [vmem:[%s322] sm:%s314] %v323
          $region217: #{subsequent_attribute_predictor_forward.1} parent=211 // loop_footer
            %s320 = sadd.s32 1, %s316
          $region218: #{subsequent_attribute_predictor_forward.1} parent=211 // loop_footer_branch
            %315 = sbr.rel target = $region214
          $region219: #{subsequent_attribute_predictor_forward.1} parent=211 // loop_exit
            _
        $region212: #{subsequent_attribute_predictor_forward.1} parent=196 // pred_fallthru
          _
      $region197: #{subsequent_attribute_predictor_forward.1} parent=72 // pred_fallthru
        _
      // Predicated region
      $region198: #{subsequent_attribute_predictor_forward.1} parent=72 // pred_check
        _
      $region199: #{subsequent_attribute_predictor_forward.1} parent=72 // pred_check_branch
        %298 = sbr.rel (0) target = $region201
      $region200: #{subsequent_attribute_predictor_forward.1} parent=72 // pred_region
        %s300 = ssub.s32 2, 1
        loop: start=0, step=1, limit=1
        $region202: #{subsequent_attribute_predictor_forward.1} parent=200 // loop_pre_header
          _
        $region203: #{subsequent_attribute_predictor_forward.1} parent=200 // loop_header
          %s302 = sphi 0, %s306
          %p303 = scmp.ge.s32.totalorder %s302, 1
          %s307 = sphi %s292, %s292
          %s308 = sphi %s293, %s293
        $region204: #{subsequent_attribute_predictor_forward.1} parent=200 // loop_header_branch
          %305 = sbr.rel (%p303) target = $region208
        $region205: #{subsequent_attribute_predictor_forward.1} parent=200 // loop_body
          %v309 = vld [vmem:[%s307] sm:%s300]
          %310 = vst [vmem:[%s308] sm:%s300] %v309
        $region206: #{subsequent_attribute_predictor_forward.1} parent=200 // loop_footer
          %s306 = sadd.s32 1, %s302
        $region207: #{subsequent_attribute_predictor_forward.1} parent=200 // loop_footer_branch
          %301 = sbr.rel target = $region203
        $region208: #{subsequent_attribute_predictor_forward.1} parent=200 // loop_exit
          _
      $region201: #{subsequent_attribute_predictor_forward.1} parent=72 // pred_fallthru
        _
      // Predicated region
      $region220: #{subsequent_attribute_predictor_forward.1} parent=72 // pred_check
        _
      $region221: #{subsequent_attribute_predictor_forward.1} parent=72 // pred_check_branch
        %327 = sbr.rel (0) target = $region223
      $region222: #{subsequent_attribute_predictor_forward.1} parent=72 // pred_region
        %328 = vsyncadd %s294, 16
      $region223: #{subsequent_attribute_predictor_forward.1} parent=72 // pred_fallthru
        _
      %s329 = sld [smem:[#allocation6 + $0x5]]
      %s330 = scalar_lea.vmem %s2, %s329
      %s331 = scalar_lea.vmem [#allocation3], 5
      %s332 = scalar_lea.sflag [#allocation4], 5
      // Predicated region
      $region224: #{subsequent_attribute_predictor_forward.1} parent=72 // pred_check
        _
      $region225: #{subsequent_attribute_predictor_forward.1} parent=72 // pred_check_branch
        %334 = sbr.rel target = $region227
      $region226: #{subsequent_attribute_predictor_forward.1} parent=72 // pred_region
        // Predicated region
        $region239: #{subsequent_attribute_predictor_forward.1} parent=226 // pred_check
          _
        $region240: #{subsequent_attribute_predictor_forward.1} parent=226 // pred_check_branch
          %350 = sbr.rel (0) target = $region242
        $region241: #{subsequent_attribute_predictor_forward.1} parent=226 // pred_region
          %s352 = ssub.s32 2, 1
          loop: start=0, step=1, limit=1
          $region243: #{subsequent_attribute_predictor_forward.1} parent=241 // loop_pre_header
            _
          $region244: #{subsequent_attribute_predictor_forward.1} parent=241 // loop_header
            %s354 = sphi 0, %s358
            %p355 = scmp.ge.s32.totalorder %s354, 1
            %s359 = sphi %s330, %s330
            %s360 = sphi %s331, %s331
          $region245: #{subsequent_attribute_predictor_forward.1} parent=241 // loop_header_branch
            %357 = sbr.rel (%p355) target = $region249
          $region246: #{subsequent_attribute_predictor_forward.1} parent=241 // loop_body
            %v361 = vld [vmem:[%s359] sm:%s352]
            %362 = vst [vmem:[%s360] sm:%s352] %v361
          $region247: #{subsequent_attribute_predictor_forward.1} parent=241 // loop_footer
            %s358 = sadd.s32 1, %s354
          $region248: #{subsequent_attribute_predictor_forward.1} parent=241 // loop_footer_branch
            %353 = sbr.rel target = $region244
          $region249: #{subsequent_attribute_predictor_forward.1} parent=241 // loop_exit
            _
        $region242: #{subsequent_attribute_predictor_forward.1} parent=226 // pred_fallthru
          _
      $region227: #{subsequent_attribute_predictor_forward.1} parent=72 // pred_fallthru
        _
      // Predicated region
      $region228: #{subsequent_attribute_predictor_forward.1} parent=72 // pred_check
        _
      $region229: #{subsequent_attribute_predictor_forward.1} parent=72 // pred_check_branch
        %336 = sbr.rel (0) target = $region231
      $region230: #{subsequent_attribute_predictor_forward.1} parent=72 // pred_region
        %s338 = ssub.s32 2, 1
        loop: start=0, step=1, limit=1
        $region232: #{subsequent_attribute_predictor_forward.1} parent=230 // loop_pre_header
          _
        $region233: #{subsequent_attribute_predictor_forward.1} parent=230 // loop_header
          %s340 = sphi 0, %s344
          %p341 = scmp.ge.s32.totalorder %s340, 1
          %s345 = sphi %s330, %s330
          %s346 = sphi %s331, %s331
        $region234: #{subsequent_attribute_predictor_forward.1} parent=230 // loop_header_branch
          %343 = sbr.rel (%p341) target = $region238
        $region235: #{subsequent_attribute_predictor_forward.1} parent=230 // loop_body
          %v347 = vld [vmem:[%s345] sm:%s338]
          %348 = vst [vmem:[%s346] sm:%s338] %v347
        $region236: #{subsequent_attribute_predictor_forward.1} parent=230 // loop_footer
          %s344 = sadd.s32 1, %s340
        $region237: #{subsequent_attribute_predictor_forward.1} parent=230 // loop_footer_branch
          %339 = sbr.rel target = $region233
        $region238: #{subsequent_attribute_predictor_forward.1} parent=230 // loop_exit
          _
      $region231: #{subsequent_attribute_predictor_forward.1} parent=72 // pred_fallthru
        _
      // Predicated region
      $region250: #{subsequent_attribute_predictor_forward.1} parent=72 // pred_check
        _
      $region251: #{subsequent_attribute_predictor_forward.1} parent=72 // pred_check_branch
        %365 = sbr.rel (0) target = $region253
      $region252: #{subsequent_attribute_predictor_forward.1} parent=72 // pred_region
        %366 = vsyncadd %s332, 16
      $region253: #{subsequent_attribute_predictor_forward.1} parent=72 // pred_fallthru
        _
      %s367 = sld [smem:[#allocation6 + $0x6]]
      %s368 = scalar_lea.vmem %s2, %s367
      %s369 = scalar_lea.vmem [#allocation3], 6
      %s370 = scalar_lea.sflag [#allocation4], 6
      // Predicated region
      $region254: #{subsequent_attribute_predictor_forward.1} parent=72 // pred_check
        _
      $region255: #{subsequent_attribute_predictor_forward.1} parent=72 // pred_check_branch
        %372 = sbr.rel target = $region257
      $region256: #{subsequent_attribute_predictor_forward.1} parent=72 // pred_region
        // Predicated region
        $region269: #{subsequent_attribute_predictor_forward.1} parent=256 // pred_check
          _
        $region270: #{subsequent_attribute_predictor_forward.1} parent=256 // pred_check_branch
          %388 = sbr.rel (0) target = $region272
        $region271: #{subsequent_attribute_predictor_forward.1} parent=256 // pred_region
          %s390 = ssub.s32 2, 1
          loop: start=0, step=1, limit=1
          $region273: #{subsequent_attribute_predictor_forward.1} parent=271 // loop_pre_header
            _
          $region274: #{subsequent_attribute_predictor_forward.1} parent=271 // loop_header
            %s392 = sphi 0, %s396
            %p393 = scmp.ge.s32.totalorder %s392, 1
            %s397 = sphi %s368, %s368
            %s398 = sphi %s369, %s369
          $region275: #{subsequent_attribute_predictor_forward.1} parent=271 // loop_header_branch
            %395 = sbr.rel (%p393) target = $region279
          $region276: #{subsequent_attribute_predictor_forward.1} parent=271 // loop_body
            %v399 = vld [vmem:[%s397] sm:%s390]
            %400 = vst [vmem:[%s398] sm:%s390] %v399
          $region277: #{subsequent_attribute_predictor_forward.1} parent=271 // loop_footer
            %s396 = sadd.s32 1, %s392
          $region278: #{subsequent_attribute_predictor_forward.1} parent=271 // loop_footer_branch
            %391 = sbr.rel target = $region274
          $region279: #{subsequent_attribute_predictor_forward.1} parent=271 // loop_exit
            _
        $region272: #{subsequent_attribute_predictor_forward.1} parent=256 // pred_fallthru
          _
      $region257: #{subsequent_attribute_predictor_forward.1} parent=72 // pred_fallthru
        _
      // Predicated region
      $region258: #{subsequent_attribute_predictor_forward.1} parent=72 // pred_check
        _
      $region259: #{subsequent_attribute_predictor_forward.1} parent=72 // pred_check_branch
        %374 = sbr.rel (0) target = $region261
      $region260: #{subsequent_attribute_predictor_forward.1} parent=72 // pred_region
        %s376 = ssub.s32 2, 1
        loop: start=0, step=1, limit=1
        $region262: #{subsequent_attribute_predictor_forward.1} parent=260 // loop_pre_header
          _
        $region263: #{subsequent_attribute_predictor_forward.1} parent=260 // loop_header
          %s378 = sphi 0, %s382
          %p379 = scmp.ge.s32.totalorder %s378, 1
          %s383 = sphi %s368, %s368
          %s384 = sphi %s369, %s369
        $region264: #{subsequent_attribute_predictor_forward.1} parent=260 // loop_header_branch
          %381 = sbr.rel (%p379) target = $region268
        $region265: #{subsequent_attribute_predictor_forward.1} parent=260 // loop_body
          %v385 = vld [vmem:[%s383] sm:%s376]
          %386 = vst [vmem:[%s384] sm:%s376] %v385
        $region266: #{subsequent_attribute_predictor_forward.1} parent=260 // loop_footer
          %s382 = sadd.s32 1, %s378
        $region267: #{subsequent_attribute_predictor_forward.1} parent=260 // loop_footer_branch
          %377 = sbr.rel target = $region263
        $region268: #{subsequent_attribute_predictor_forward.1} parent=260 // loop_exit
          _
      $region261: #{subsequent_attribute_predictor_forward.1} parent=72 // pred_fallthru
        _
      // Predicated region
      $region280: #{subsequent_attribute_predictor_forward.1} parent=72 // pred_check
        _
      $region281: #{subsequent_attribute_predictor_forward.1} parent=72 // pred_check_branch
        %403 = sbr.rel (0) target = $region283
      $region282: #{subsequent_attribute_predictor_forward.1} parent=72 // pred_region
        %404 = vsyncadd %s370, 16
      $region283: #{subsequent_attribute_predictor_forward.1} parent=72 // pred_fallthru
        _
      %s405 = sld [smem:[#allocation6 + $0x7]]
      %s406 = scalar_lea.vmem %s2, %s405
      %s407 = scalar_lea.vmem [#allocation3], 7
      %s408 = scalar_lea.sflag [#allocation4], 7
      // Predicated region
      $region284: #{subsequent_attribute_predictor_forward.1} parent=72 // pred_check
        _
      $region285: #{subsequent_attribute_predictor_forward.1} parent=72 // pred_check_branch
        %410 = sbr.rel target = $region287
      $region286: #{subsequent_attribute_predictor_forward.1} parent=72 // pred_region
        // Predicated region
        $region299: #{subsequent_attribute_predictor_forward.1} parent=286 // pred_check
          _
        $region300: #{subsequent_attribute_predictor_forward.1} parent=286 // pred_check_branch
          %426 = sbr.rel (0) target = $region302
        $region301: #{subsequent_attribute_predictor_forward.1} parent=286 // pred_region
          %s428 = ssub.s32 2, 1
          loop: start=0, step=1, limit=1
          $region303: #{subsequent_attribute_predictor_forward.1} parent=301 // loop_pre_header
            _
          $region304: #{subsequent_attribute_predictor_forward.1} parent=301 // loop_header
            %s430 = sphi 0, %s434
            %p431 = scmp.ge.s32.totalorder %s430, 1
            %s435 = sphi %s406, %s406
            %s436 = sphi %s407, %s407
          $region305: #{subsequent_attribute_predictor_forward.1} parent=301 // loop_header_branch
            %433 = sbr.rel (%p431) target = $region309
          $region306: #{subsequent_attribute_predictor_forward.1} parent=301 // loop_body
            %v437 = vld [vmem:[%s435] sm:%s428]
            %438 = vst [vmem:[%s436] sm:%s428] %v437
          $region307: #{subsequent_attribute_predictor_forward.1} parent=301 // loop_footer
            %s434 = sadd.s32 1, %s430
          $region308: #{subsequent_attribute_predictor_forward.1} parent=301 // loop_footer_branch
            %429 = sbr.rel target = $region304
          $region309: #{subsequent_attribute_predictor_forward.1} parent=301 // loop_exit
            _
        $region302: #{subsequent_attribute_predictor_forward.1} parent=286 // pred_fallthru
          _
      $region287: #{subsequent_attribute_predictor_forward.1} parent=72 // pred_fallthru
        _
      // Predicated region
      $region288: #{subsequent_attribute_predictor_forward.1} parent=72 // pred_check
        _
      $region289: #{subsequent_attribute_predictor_forward.1} parent=72 // pred_check_branch
        %412 = sbr.rel (0) target = $region291
      $region290: #{subsequent_attribute_predictor_forward.1} parent=72 // pred_region
        %s414 = ssub.s32 2, 1
        loop: start=0, step=1, limit=1
        $region292: #{subsequent_attribute_predictor_forward.1} parent=290 // loop_pre_header
          _
        $region293: #{subsequent_attribute_predictor_forward.1} parent=290 // loop_header
          %s416 = sphi 0, %s420
          %p417 = scmp.ge.s32.totalorder %s416, 1
          %s421 = sphi %s406, %s406
          %s422 = sphi %s407, %s407
        $region294: #{subsequent_attribute_predictor_forward.1} parent=290 // loop_header_branch
          %419 = sbr.rel (%p417) target = $region298
        $region295: #{subsequent_attribute_predictor_forward.1} parent=290 // loop_body
          %v423 = vld [vmem:[%s421] sm:%s414]
          %424 = vst [vmem:[%s422] sm:%s414] %v423
        $region296: #{subsequent_attribute_predictor_forward.1} parent=290 // loop_footer
          %s420 = sadd.s32 1, %s416
        $region297: #{subsequent_attribute_predictor_forward.1} parent=290 // loop_footer_branch
          %415 = sbr.rel target = $region293
        $region298: #{subsequent_attribute_predictor_forward.1} parent=290 // loop_exit
          _
      $region291: #{subsequent_attribute_predictor_forward.1} parent=72 // pred_fallthru
        _
      // Predicated region
      $region310: #{subsequent_attribute_predictor_forward.1} parent=72 // pred_check
        _
      $region311: #{subsequent_attribute_predictor_forward.1} parent=72 // pred_check_branch
        %441 = sbr.rel (0) target = $region313
      $region312: #{subsequent_attribute_predictor_forward.1} parent=72 // pred_region
        %442 = vsyncadd %s408, 16
      $region313: #{subsequent_attribute_predictor_forward.1} parent=72 // pred_fallthru
        _
    $region73: #{subsequent_attribute_predictor_forward.1} parent=1 // pred_fallthru
      _
    %v443 = vld [vmem:[%s1] sm:$0xf]
    %v444 = vld [vmem:[%s1 + $0x4] sm:$0xf]
    %v445 = vld [vmem:[%s1 + $0x8] sm:$0xf]
    %v446 = vld [vmem:[%s1 + $0xc] sm:$0xf]
    %v447 = vld [vmem:[%s1 + $0x10] sm:$0xf]
    %v448 = vld [vmem:[%s1 + $0x14] sm:$0xf]
    %v449 = vld [vmem:[%s1 + $0x18] sm:$0xf]
    %v450 = vld [vmem:[%s1 + $0x1c] sm:$0xf]
    %v451 = vld [vmem:[%s1 + $0x20] sm:$0xf]
    %v452 = vld [vmem:[%s1 + $0x24] sm:$0xf]
    %v453 = vld [vmem:[%s1 + $0x28] sm:$0xf]
    %v454 = vld [vmem:[%s1 + $0x2c] sm:$0xf]
    %v455 = vld [vmem:[%s1 + $0x30] sm:$0xf]
    %v456 = vld [vmem:[%s1 + $0x34] sm:$0xf]
    %v457 = vld [vmem:[%s1 + $0x38] sm:$0xf]
    %v458 = vld [vmem:[%s1 + $0x3c] sm:$0xf]
    %v459 = vld [vmem:[%s3] sm:$0xf]
    %v460 = vld [vmem:[%s3 + $0x4] sm:$0xf]
    %v461 = vld [vmem:[%s3 + $0x8] sm:$0xf]
    %v462 = vld [vmem:[%s3 + $0xc] sm:$0xf]
    %v463 = vld [vmem:[%s3 + $0x10] sm:$0xf]
    %v464 = vld [vmem:[%s3 + $0x14] sm:$0xf]
    %v465 = vld [vmem:[%s3 + $0x18] sm:$0xf]
    %v466 = vld [vmem:[%s3 + $0x1c] sm:$0xf]
    %v467 = vld [vmem:[%s3 + $0x20] sm:$0xf]
    %v468 = vld [vmem:[%s3 + $0x24] sm:$0xf]
    %v469 = vld [vmem:[%s3 + $0x28] sm:$0xf]
    %v470 = vld [vmem:[%s3 + $0x2c] sm:$0xf]
    %v471 = vld [vmem:[%s3 + $0x30] sm:$0xf]
    %v472 = vld [vmem:[%s3 + $0x34] sm:$0xf]
    %v473 = vld [vmem:[%s3 + $0x38] sm:$0xf]
    %v474 = vld [vmem:[%s3 + $0x3c] sm:$0xf]
    %v491 = vunpack.c.l.b16 %v443
    %v492 = vunpack.c.l.b16 %v444
    %v493 = vunpack.c.l.b16 %v445
    %v494 = vunpack.c.l.b16 %v446
    %v495 = vunpack.c.l.b16 %v447
    %v496 = vunpack.c.l.b16 %v448
    %v497 = vunpack.c.l.b16 %v449
    %v498 = vunpack.c.l.b16 %v450
    %v499 = vunpack.c.l.b16 %v451
    %v500 = vunpack.c.l.b16 %v452
    %v501 = vunpack.c.l.b16 %v453
    %v502 = vunpack.c.l.b16 %v454
    %v503 = vunpack.c.l.b16 %v455
    %v504 = vunpack.c.l.b16 %v456
    %v505 = vunpack.c.l.b16 %v457
    %v506 = vunpack.c.l.b16 %v458
    %v507 = vpack.c.b16 %v492, %v491
    %v508 = vpack.c.b16 %v494, %v493
    %v509 = vpack.c.b16 %v496, %v495
    %v510 = vpack.c.b16 %v498, %v497
    %v511 = vpack.c.b16 %v500, %v499
    %v512 = vpack.c.b16 %v502, %v501
    %v513 = vpack.c.b16 %v504, %v503
    %v514 = vpack.c.b16 %v506, %v505
    %v539 = vunpack.c.l.b16 %v459
    %v540 = vunpack.c.l.b16 %v460
    %v541 = vunpack.c.l.b16 %v461
    %v542 = vunpack.c.l.b16 %v462
    %v543 = vunpack.c.l.b16 %v463
    %v544 = vunpack.c.l.b16 %v464
    %v545 = vunpack.c.l.b16 %v465
    %v546 = vunpack.c.l.b16 %v466
    %v547 = vunpack.c.l.b16 %v467
    %v548 = vunpack.c.l.b16 %v468
    %v549 = vunpack.c.l.b16 %v469
    %v550 = vunpack.c.l.b16 %v470
    %v551 = vunpack.c.l.b16 %v471
    %v552 = vunpack.c.l.b16 %v472
    %v553 = vunpack.c.l.b16 %v473
    %v554 = vunpack.c.l.b16 %v474
    %v555 = vpack.c.b16 %v540, %v539
    %v556 = vpack.c.b16 %v542, %v541
    %v557 = vpack.c.b16 %v544, %v543
    %v558 = vpack.c.b16 %v546, %v545
    %v559 = vpack.c.b16 %v548, %v547
    %v560 = vpack.c.b16 %v550, %v549
    %v561 = vpack.c.b16 %v552, %v551
    %v562 = vpack.c.b16 %v554, %v553
    %571 = vmatpush.bf16.msra.mxu0 %v562
    %572 = vmatpush.bf16.msra.mxu0 %v561
    %573 = vmatpush.bf16.msra.mxu0 %v560
    %574 = vmatpush.bf16.msra.mxu0 %v559
    %575 = vmatpush.bf16.msra.mxu0 %v558
    %576 = vmatpush.bf16.msra.mxu0 %v557
    %577 = vmatpush.bf16.msra.mxu0 %v556
    %578 = vmatpush.bf16.msra.mxu0 %v555
    %579 = vmatmul.bf16.gmra.mxu0 %v507
    %v580 = vpop.f32.mrf.mxu0
    %v581 = vadd.f32 0.0, %v580
    %v582 = vpop.f32.mrf.mxu0
    %v583 = vadd.f32 0.0, %v582
    %584 = vmatmul.bf16.gmra.mxu0 %v508
    %v585 = vpop.f32.mrf.mxu0
    %v586 = vadd.f32 0.0, %v585
    %v587 = vpop.f32.mrf.mxu0
    %v588 = vadd.f32 0.0, %v587
    %589 = vmatmul.bf16.gmra.mxu0 %v509
    %v590 = vpop.f32.mrf.mxu0
    %v591 = vadd.f32 0.0, %v590
    %v592 = vpop.f32.mrf.mxu0
    %v593 = vadd.f32 0.0, %v592
    %594 = vmatmul.bf16.gmra.mxu0 %v510
    %v595 = vpop.f32.mrf.mxu0
    %v596 = vadd.f32 0.0, %v595
    %v597 = vpop.f32.mrf.mxu0
    %v598 = vadd.f32 0.0, %v597
    %599 = vmatmul.bf16.gmra.mxu0 %v511
    %v600 = vpop.f32.mrf.mxu0
    %v601 = vadd.f32 0.0, %v600
    %v602 = vpop.f32.mrf.mxu0
    %v603 = vadd.f32 0.0, %v602
    %604 = vmatmul.bf16.gmra.mxu0 %v512
    %v605 = vpop.f32.mrf.mxu0
    %v606 = vadd.f32 0.0, %v605
    %v607 = vpop.f32.mrf.mxu0
    %v608 = vadd.f32 0.0, %v607
    %609 = vmatmul.bf16.gmra.mxu0 %v513
    %v610 = vpop.f32.mrf.mxu0
    %v611 = vadd.f32 0.0, %v610
    %v612 = vpop.f32.mrf.mxu0
    %v613 = vadd.f32 0.0, %v612
    %614 = vmatmul.bf16.gmra.mxu0 %v514
    %v615 = vpop.f32.mrf.mxu0
    %v616 = vadd.f32 0.0, %v615
    %v617 = vpop.f32.mrf.mxu0
    %v618 = vadd.f32 0.0, %v617
    %619 = vdwg.mxu0
    %v620 = vpack.c.bf16 %v583, %v581
    %v621 = vpack.c.bf16 %v588, %v586
    %v622 = vpack.c.bf16 %v593, %v591
    %v623 = vpack.c.bf16 %v598, %v596
    %v624 = vpack.c.bf16 %v603, %v601
    %v625 = vpack.c.bf16 %v608, %v606
    %v626 = vpack.c.bf16 %v613, %v611
    %v627 = vpack.c.bf16 %v618, %v616
    %v628 = vld [vmem:[#allocation7] sm:$0xf]
    %v629 = vld [vmem:[#allocation7 + $0x4] sm:$0xf]
    %v630 = vld [vmem:[#allocation7 + $0x8] sm:$0xf]
    %v631 = vld [vmem:[#allocation7 + $0xc] sm:$0xf]
    %v632 = vld [vmem:[#allocation7 + $0x10] sm:$0xf]
    %v633 = vld [vmem:[#allocation7 + $0x14] sm:$0xf]
    %v634 = vld [vmem:[#allocation7 + $0x18] sm:$0xf]
    %v635 = vld [vmem:[#allocation7 + $0x1c] sm:$0xf]
    %v636 = vld [vmem:[#allocation7 + $0x20] sm:$0xf]
    %v637 = vld [vmem:[#allocation7 + $0x24] sm:$0xf]
    %v638 = vld [vmem:[#allocation7 + $0x28] sm:$0xf]
    %v639 = vld [vmem:[#allocation7 + $0x2c] sm:$0xf]
    %v640 = vld [vmem:[#allocation7 + $0x30] sm:$0xf]
    %v641 = vld [vmem:[#allocation7 + $0x34] sm:$0xf]
    %v642 = vld [vmem:[#allocation7 + $0x38] sm:$0xf]
    %v643 = vld [vmem:[#allocation7 + $0x3c] sm:$0xf]
    %v644 = vld [vmem:[%s5] sm:$0x1]
    %v646 = vperm.slane %v644, 0
    %v664 = vunpack.c.l.b16 %v628
    %v665 = vunpack.c.l.b16 %v629
    %v666 = vunpack.c.l.b16 %v630
    %v667 = vunpack.c.l.b16 %v631
    %v668 = vunpack.c.l.b16 %v632
    %v669 = vunpack.c.l.b16 %v633
    %v670 = vunpack.c.l.b16 %v634
    %v671 = vunpack.c.l.b16 %v635
    %v672 = vunpack.c.l.b16 %v636
    %v673 = vunpack.c.l.b16 %v637
    %v674 = vunpack.c.l.b16 %v638
    %v675 = vunpack.c.l.b16 %v639
    %v676 = vunpack.c.l.b16 %v640
    %v677 = vunpack.c.l.b16 %v641
    %v678 = vunpack.c.l.b16 %v642
    %v679 = vunpack.c.l.b16 %v643
    %v680 = vpack.c.b16 %v665, %v664
    %v681 = vpack.c.b16 %v667, %v666
    %v682 = vpack.c.b16 %v669, %v668
    %v683 = vpack.c.b16 %v671, %v670
    %v684 = vpack.c.b16 %v673, %v672
    %v685 = vpack.c.b16 %v675, %v674
    %v686 = vpack.c.b16 %v677, %v676
    %v687 = vpack.c.b16 %v679, %v678
    %696 = vmatpush.bf16.msra.mxu0 %v687
    %697 = vmatpush.bf16.msra.mxu0 %v686
    %698 = vmatpush.bf16.msra.mxu0 %v685
    %699 = vmatpush.bf16.msra.mxu0 %v684
    %700 = vmatpush.bf16.msra.mxu0 %v683
    %701 = vmatpush.bf16.msra.mxu0 %v682
    %702 = vmatpush.bf16.msra.mxu0 %v681
    %703 = vmatpush.bf16.msra.mxu0 %v680
    %704 = vmatmul.bf16.gmra.mxu0 %v620
    %v705 = vpop.f32.mrf.mxu0
    %v706 = vadd.f32 %v646, %v705
    %v707 = vpop.f32.mrf.mxu0
    %v708 = vadd.f32 %v646, %v707
    %709 = vmatmul.bf16.gmra.mxu0 %v621
    %v710 = vpop.f32.mrf.mxu0
    %v711 = vadd.f32 %v646, %v710
    %v712 = vpop.f32.mrf.mxu0
    %v713 = vadd.f32 %v646, %v712
    %714 = vmatmul.bf16.gmra.mxu0 %v622
    %v715 = vpop.f32.mrf.mxu0
    %v716 = vadd.f32 %v646, %v715
    %v717 = vpop.f32.mrf.mxu0
    %v718 = vadd.f32 %v646, %v717
    %719 = vmatmul.bf16.gmra.mxu0 %v623
    %v720 = vpop.f32.mrf.mxu0
    %v721 = vadd.f32 %v646, %v720
    %v722 = vpop.f32.mrf.mxu0
    %v723 = vadd.f32 %v646, %v722
    %724 = vmatmul.bf16.gmra.mxu0 %v624
    %v725 = vpop.f32.mrf.mxu0
    %v726 = vadd.f32 %v646, %v725
    %v727 = vpop.f32.mrf.mxu0
    %v728 = vadd.f32 %v646, %v727
    %729 = vmatmul.bf16.gmra.mxu0 %v625
    %v730 = vpop.f32.mrf.mxu0
    %v731 = vadd.f32 %v646, %v730
    %v732 = vpop.f32.mrf.mxu0
    %v733 = vadd.f32 %v646, %v732
    %734 = vmatmul.bf16.gmra.mxu0 %v626
    %v735 = vpop.f32.mrf.mxu0
    %v736 = vadd.f32 %v646, %v735
    %v737 = vpop.f32.mrf.mxu0
    %v738 = vadd.f32 %v646, %v737
    %739 = vmatmul.bf16.gmra.mxu0 %v627
    %v740 = vpop.f32.mrf.mxu0
    %v741 = vadd.f32 %v646, %v740
    %v742 = vpop.f32.mrf.mxu0
    %v743 = vadd.f32 %v646, %v742
    %744 = vdwg.mxu0
    %vm745 = vcmp.gt.f32.partialorder %v706, 0.0
    %vm746 = vcmp.gt.f32.partialorder %v708, 0.0
    %vm747 = vcmp.gt.f32.partialorder %v711, 0.0
    %vm748 = vcmp.gt.f32.partialorder %v713, 0.0
    %vm749 = vcmp.gt.f32.partialorder %v716, 0.0
    %vm750 = vcmp.gt.f32.partialorder %v718, 0.0
    %vm751 = vcmp.gt.f32.partialorder %v721, 0.0
    %vm752 = vcmp.gt.f32.partialorder %v723, 0.0
    %vm753 = vcmp.gt.f32.partialorder %v726, 0.0
    %vm754 = vcmp.gt.f32.partialorder %v728, 0.0
    %vm755 = vcmp.gt.f32.partialorder %v731, 0.0
    %vm756 = vcmp.gt.f32.partialorder %v733, 0.0
    %vm757 = vcmp.gt.f32.partialorder %v736, 0.0
    %vm758 = vcmp.gt.f32.partialorder %v738, 0.0
    %vm759 = vcmp.gt.f32.partialorder %v741, 0.0
    %vm760 = vcmp.gt.f32.partialorder %v743, 0.0
    %v761 = vmul.f32 %v706, 0.1
    %v762 = vmul.f32 %v708, 0.1
    %v763 = vmul.f32 %v711, 0.1
    %v764 = vmul.f32 %v713, 0.1
    %v765 = vmul.f32 %v716, 0.1
    %v766 = vmul.f32 %v718, 0.1
    %v767 = vmul.f32 %v721, 0.1
    %v768 = vmul.f32 %v723, 0.1
    %v769 = vmul.f32 %v726, 0.1
    %v770 = vmul.f32 %v728, 0.1
    %v771 = vmul.f32 %v731, 0.1
    %v772 = vmul.f32 %v733, 0.1
    %v773 = vmul.f32 %v736, 0.1
    %v774 = vmul.f32 %v738, 0.1
    %v775 = vmul.f32 %v741, 0.1
    %v776 = vmul.f32 %v743, 0.1
    %v777 = vsel %vm745, %v706, %v761
    %v778 = vsel %vm746, %v708, %v762
    %v779 = vsel %vm747, %v711, %v763
    %v780 = vsel %vm748, %v713, %v764
    %v781 = vsel %vm749, %v716, %v765
    %v782 = vsel %vm750, %v718, %v766
    %v783 = vsel %vm751, %v721, %v767
    %v784 = vsel %vm752, %v723, %v768
    %v785 = vsel %vm753, %v726, %v769
    %v786 = vsel %vm754, %v728, %v770
    %v787 = vsel %vm755, %v731, %v771
    %v788 = vsel %vm756, %v733, %v772
    %v789 = vsel %vm757, %v736, %v773
    %v790 = vsel %vm758, %v738, %v774
    %v791 = vsel %vm759, %v741, %v775
    %v792 = vsel %vm760, %v743, %v776
    %s793 = smul.u32 0, 128
    %v794 = vpack.c.bf16 %v777, %v777
    %v795 = vpack.c.bf16 %v778, %v778
    %v796 = vpack.c.bf16 %v779, %v779
    %v797 = vpack.c.bf16 %v780, %v780
    %v798 = vpack.c.bf16 %v781, %v781
    %v799 = vpack.c.bf16 %v782, %v782
    %v800 = vpack.c.bf16 %v783, %v783
    %v801 = vpack.c.bf16 %v784, %v784
    %v802 = vpack.c.bf16 %v785, %v785
    %v803 = vpack.c.bf16 %v786, %v786
    %v804 = vpack.c.bf16 %v787, %v787
    %v805 = vpack.c.bf16 %v788, %v788
    %v806 = vpack.c.bf16 %v789, %v789
    %v807 = vpack.c.bf16 %v790, %v790
    %v808 = vpack.c.bf16 %v791, %v791
    %v809 = vpack.c.bf16 %v792, %v792
    %s810 = sshra.s32 %s793, 3
    %s811 = sand.u32 %s793, 7
    %s812 = smul.addr %s810, 4
    %s813 = scalar_lea.vmem [#allocation2], %s812
    %814 = vst [vmem:[%s813] sm:$0xf] %v794
    %815 = vst [vmem:[%s813 + $0x4] sm:$0xf] %v795
    %816 = vst [vmem:[%s813 + $0x8] sm:$0xf] %v796
    %817 = vst [vmem:[%s813 + $0xc] sm:$0xf] %v797
    %818 = vst [vmem:[%s813 + $0x10] sm:$0xf] %v798
    %819 = vst [vmem:[%s813 + $0x14] sm:$0xf] %v799
    %820 = vst [vmem:[%s813 + $0x18] sm:$0xf] %v800
    %821 = vst [vmem:[%s813 + $0x1c] sm:$0xf] %v801
    %822 = vst [vmem:[%s813 + $0x20] sm:$0xf] %v802
    %823 = vst [vmem:[%s813 + $0x24] sm:$0xf] %v803
    %824 = vst [vmem:[%s813 + $0x28] sm:$0xf] %v804
    %825 = vst [vmem:[%s813 + $0x2c] sm:$0xf] %v805
    %826 = vst [vmem:[%s813 + $0x30] sm:$0xf] %v806
    %827 = vst [vmem:[%s813 + $0x34] sm:$0xf] %v807
    %828 = vst [vmem:[%s813 + $0x38] sm:$0xf] %v808
    %829 = vst [vmem:[%s813 + $0x3c] sm:$0xf] %v809
    // Predicated region
    $region314: #{subsequent_attribute_predictor_forward.1} parent=1 // pred_check
      %p830 = pneg %p137
    $region315: #{subsequent_attribute_predictor_forward.1} parent=1 // pred_check_branch
      %832 = sbr.rel (%p830) target = $region317
    $region316: #{subsequent_attribute_predictor_forward.1} parent=1 // pred_region
      %s833 = sld [smem:[#allocation6]]
      %s834 = smul.u32 1, 1
      %s835 = sshll.u32 %s834, 4
      %836 = dma.done [#allocation4], %s835
      %s837 = sld [smem:[#allocation6 + $0x1]]
      %s838 = scalar_lea.sflag [#allocation4], 1
      %s839 = sshll.u32 %s834, 4
      %840 = dma.done %s838, %s839
      %s841 = sld [smem:[#allocation6 + $0x2]]
      %s842 = scalar_lea.sflag [#allocation4], 2
      %s843 = sshll.u32 %s834, 4
      %844 = dma.done %s842, %s843
      %s845 = sld [smem:[#allocation6 + $0x3]]
      %s846 = scalar_lea.sflag [#allocation4], 3
      %s847 = sshll.u32 %s834, 4
      %848 = dma.done %s846, %s847
      %s849 = sld [smem:[#allocation6 + $0x4]]
      %s850 = scalar_lea.sflag [#allocation4], 4
      %s851 = sshll.u32 %s834, 4
      %852 = dma.done %s850, %s851
      %s853 = sld [smem:[#allocation6 + $0x5]]
      %s854 = scalar_lea.sflag [#allocation4], 5
      %s855 = sshll.u32 %s834, 4
      %856 = dma.done %s854, %s855
      %s857 = sld [smem:[#allocation6 + $0x6]]
      %s858 = scalar_lea.sflag [#allocation4], 6
      %s859 = sshll.u32 %s834, 4
      %860 = dma.done %s858, %s859
      %s861 = sld [smem:[#allocation6 + $0x7]]
      %s862 = scalar_lea.sflag [#allocation4], 7
      %s863 = sshll.u32 %s834, 4
      %864 = dma.done %s862, %s863
      %v865 = vld [vmem:[#allocation3] sm:$0xff]
      %v866 = vpack.c.bf16 %v865, %v865
      %v867 = vld [vmem:[#allocation2] sm:$0xf]
      %v868 = vld [vmem:[#allocation2 + $0x4] sm:$0xf]
      %v869 = vld [vmem:[#allocation2 + $0x8] sm:$0xf]
      %v870 = vld [vmem:[#allocation2 + $0xc] sm:$0xf]
      %v871 = vld [vmem:[#allocation2 + $0x10] sm:$0xf]
      %v872 = vld [vmem:[#allocation2 + $0x14] sm:$0xf]
      %v873 = vld [vmem:[#allocation2 + $0x18] sm:$0xf]
      %v874 = vld [vmem:[#allocation2 + $0x1c] sm:$0xf]
      %v875 = vld [vmem:[#allocation2 + $0x20] sm:$0xf]
      %v876 = vld [vmem:[#allocation2 + $0x24] sm:$0xf]
      %v877 = vld [vmem:[#allocation2 + $0x28] sm:$0xf]
      %v878 = vld [vmem:[#allocation2 + $0x2c] sm:$0xf]
      %v879 = vld [vmem:[#allocation2 + $0x30] sm:$0xf]
      %v880 = vld [vmem:[#allocation2 + $0x34] sm:$0xf]
      %v881 = vld [vmem:[#allocation2 + $0x38] sm:$0xf]
      %v882 = vld [vmem:[#allocation2 + $0x3c] sm:$0xf]
      %v899 = vunpack.c.l.b16 %v867
      %v900 = vunpack.c.l.b16 %v868
      %v901 = vunpack.c.l.b16 %v869
      %v902 = vunpack.c.l.b16 %v870
      %v903 = vunpack.c.l.b16 %v871
      %v904 = vunpack.c.l.b16 %v872
      %v905 = vunpack.c.l.b16 %v873
      %v906 = vunpack.c.l.b16 %v874
      %v907 = vunpack.c.l.b16 %v875
      %v908 = vunpack.c.l.b16 %v876
      %v909 = vunpack.c.l.b16 %v877
      %v910 = vunpack.c.l.b16 %v878
      %v911 = vunpack.c.l.b16 %v879
      %v912 = vunpack.c.l.b16 %v880
      %v913 = vunpack.c.l.b16 %v881
      %v914 = vunpack.c.l.b16 %v882
      %v915 = vpack.c.b16 %v900, %v899
      %v916 = vpack.c.b16 %v902, %v901
      %v917 = vpack.c.b16 %v904, %v903
      %v918 = vpack.c.b16 %v906, %v905
      %v919 = vpack.c.b16 %v908, %v907
      %v920 = vpack.c.b16 %v910, %v909
      %v921 = vpack.c.b16 %v912, %v911
      %v922 = vpack.c.b16 %v914, %v913
      %931 = vmatpush.bf16.msra.mxu0 %v922
      %932 = vmatpush.bf16.msra.mxu0 %v921
      %933 = vmatpush.bf16.msra.mxu0 %v920
      %934 = vmatpush.bf16.msra.mxu0 %v919
      %935 = vmatpush.bf16.msra.mxu0 %v918
      %936 = vmatpush.bf16.msra.mxu0 %v917
      %937 = vmatpush.bf16.msra.mxu0 %v916
      %938 = vmatpush.bf16.msra.mxu0 %v915
      %939 = vmatmul.bf16.gmra.mxu0 %v866
      %v940 = vpop.f32.mrf.mxu0
      %v941 = vadd.f32 0.0, %v940
      %v942 = vpop.f32.mrf.mxu0
      %943 = vdwg.mxu0
      %v944 = vpack.c.bf16 %v941, %v941
      %v945 = vld [vmem:[#allocation10] sm:$0xf]
      %v946 = vld [vmem:[#allocation10 + $0x4] sm:$0xf]
      %v947 = vld [vmem:[#allocation10 + $0x8] sm:$0xf]
      %v948 = vld [vmem:[#allocation10 + $0xc] sm:$0xf]
      %v949 = vld [vmem:[#allocation10 + $0x10] sm:$0xf]
      %v950 = vld [vmem:[#allocation10 + $0x14] sm:$0xf]
      %v951 = vld [vmem:[#allocation10 + $0x18] sm:$0xf]
      %v952 = vld [vmem:[#allocation10 + $0x1c] sm:$0xf]
      %v953 = vld [vmem:[#allocation10 + $0x20] sm:$0xf]
      %v954 = vld [vmem:[#allocation10 + $0x24] sm:$0xf]
      %v955 = vld [vmem:[#allocation10 + $0x28] sm:$0xf]
      %v956 = vld [vmem:[#allocation10 + $0x2c] sm:$0xf]
      %v957 = vld [vmem:[#allocation10 + $0x30] sm:$0xf]
      %v958 = vld [vmem:[#allocation10 + $0x34] sm:$0xf]
      %v959 = vld [vmem:[#allocation10 + $0x38] sm:$0xf]
      %v960 = vld [vmem:[#allocation10 + $0x3c] sm:$0xf]
      %v961 = vld [vmem:[#allocation12] sm:$0x1]
      %v963 = vperm.slane %v961, 0
      %v981 = vunpack.c.l.b16 %v945
      %v982 = vunpack.c.l.b16 %v946
      %v983 = vunpack.c.l.b16 %v947
      %v984 = vunpack.c.l.b16 %v948
      %v985 = vunpack.c.l.b16 %v949
      %v986 = vunpack.c.l.b16 %v950
      %v987 = vunpack.c.l.b16 %v951
      %v988 = vunpack.c.l.b16 %v952
      %v989 = vunpack.c.l.b16 %v953
      %v990 = vunpack.c.l.b16 %v954
      %v991 = vunpack.c.l.b16 %v955
      %v992 = vunpack.c.l.b16 %v956
      %v993 = vunpack.c.l.b16 %v957
      %v994 = vunpack.c.l.b16 %v958
      %v995 = vunpack.c.l.b16 %v959
      %v996 = vunpack.c.l.b16 %v960
      %v997 = vpack.c.b16 %v982, %v981
      %v998 = vpack.c.b16 %v984, %v983
      %v999 = vpack.c.b16 %v986, %v985
      %v1000 = vpack.c.b16 %v988, %v987
      %v1001 = vpack.c.b16 %v990, %v989
      %v1002 = vpack.c.b16 %v992, %v991
      %v1003 = vpack.c.b16 %v994, %v993
      %v1004 = vpack.c.b16 %v996, %v995
      %1013 = vmatpush.bf16.msra.mxu0 %v1004
      %1014 = vmatpush.bf16.msra.mxu0 %v1003
      %1015 = vmatpush.bf16.msra.mxu0 %v1002
      %1016 = vmatpush.bf16.msra.mxu0 %v1001
      %1017 = vmatpush.bf16.msra.mxu0 %v1000
      %1018 = vmatpush.bf16.msra.mxu0 %v999
      %1019 = vmatpush.bf16.msra.mxu0 %v998
      %1020 = vmatpush.bf16.msra.mxu0 %v997
      %1021 = vmatmul.bf16.gmra.mxu0 %v944
      %v1022 = vpop.f32.mrf.mxu0
      %v1023 = vadd.f32 %v963, %v1022
      %v1024 = vpop.f32.mrf.mxu0
      %1025 = vdwg.mxu0
      %vm1026 = vcmp.gt.f32.partialorder %v1023, 0.0
      %v1027 = vmul.f32 %v1023, 0.1
      %v1028 = vsel %vm1026, %v1023, %v1027
      %v1029 = vpack.c.bf16 %v1028, %v1028
      %v1030 = vld [vmem:[#allocation13] sm:$0xf]
      %v1031 = vld [vmem:[#allocation13 + $0x4] sm:$0xf]
      %v1032 = vld [vmem:[#allocation13 + $0x8] sm:$0xf]
      %v1033 = vld [vmem:[#allocation13 + $0xc] sm:$0xf]
      %v1034 = vld [vmem:[#allocation13 + $0x10] sm:$0xf]
      %v1035 = vld [vmem:[#allocation13 + $0x14] sm:$0xf]
      %v1036 = vld [vmem:[#allocation13 + $0x18] sm:$0xf]
      %v1037 = vld [vmem:[#allocation13 + $0x1c] sm:$0xf]
      %v1038 = vld [vmem:[#allocation13 + $0x20] sm:$0xf]
      %v1039 = vld [vmem:[#allocation13 + $0x24] sm:$0xf]
      %v1040 = vld [vmem:[#allocation13 + $0x28] sm:$0xf]
      %v1041 = vld [vmem:[#allocation13 + $0x2c] sm:$0xf]
      %v1042 = vld [vmem:[#allocation13 + $0x30] sm:$0xf]
      %v1043 = vld [vmem:[#allocation13 + $0x34] sm:$0xf]
      %v1044 = vld [vmem:[#allocation13 + $0x38] sm:$0xf]
      %v1045 = vld [vmem:[#allocation13 + $0x3c] sm:$0xf]
      %v1046 = vld [vmem:[#allocation15] sm:$0x1]
      %v1048 = vperm.slane %v1046, 0
      %v1066 = vunpack.c.l.b16 %v1030
      %v1067 = vunpack.c.l.b16 %v1031
      %v1068 = vunpack.c.l.b16 %v1032
      %v1069 = vunpack.c.l.b16 %v1033
      %v1070 = vunpack.c.l.b16 %v1034
      %v1071 = vunpack.c.l.b16 %v1035
      %v1072 = vunpack.c.l.b16 %v1036
      %v1073 = vunpack.c.l.b16 %v1037
      %v1074 = vunpack.c.l.b16 %v1038
      %v1075 = vunpack.c.l.b16 %v1039
      %v1076 = vunpack.c.l.b16 %v1040
      %v1077 = vunpack.c.l.b16 %v1041
      %v1078 = vunpack.c.l.b16 %v1042
      %v1079 = vunpack.c.l.b16 %v1043
      %v1080 = vunpack.c.l.b16 %v1044
      %v1081 = vunpack.c.l.b16 %v1045
      %v1082 = vpack.c.b16 %v1067, %v1066
      %v1083 = vpack.c.b16 %v1069, %v1068
      %v1084 = vpack.c.b16 %v1071, %v1070
      %v1085 = vpack.c.b16 %v1073, %v1072
      %v1086 = vpack.c.b16 %v1075, %v1074
      %v1087 = vpack.c.b16 %v1077, %v1076
      %v1088 = vpack.c.b16 %v1079, %v1078
      %v1089 = vpack.c.b16 %v1081, %v1080
      %1098 = vmatpush.bf16.msra.mxu0 %v1089
      %1099 = vmatpush.bf16.msra.mxu0 %v1088
      %1100 = vmatpush.bf16.msra.mxu0 %v1087
      %1101 = vmatpush.bf16.msra.mxu0 %v1086
      %1102 = vmatpush.bf16.msra.mxu0 %v1085
      %1103 = vmatpush.bf16.msra.mxu0 %v1084
      %1104 = vmatpush.bf16.msra.mxu0 %v1083
      %1105 = vmatpush.bf16.msra.mxu0 %v1082
      %1106 = vmatmul.bf16.gmra.mxu0 %v1029
      %v1107 = vpop.f32.mrf.mxu0
      %v1108 = vadd.f32 %v1048, %v1107
      %v1109 = vpop.f32.mrf.mxu0
      %1110 = vdwg.mxu0
      %v1111 = vld [vmem:[%s10] sm:$0xff]
      %v1112 = vld [vmem:[%s11] sm:$0xff]
      %v1113 = vld [vmem:[%s11 + $0x8] sm:$0xff]
      %v1114 = vld [vmem:[%s11 + $0x10] sm:$0xff]
      %v1115 = vld [vmem:[%s11 + $0x18] sm:$0xff]
      %v1116 = vld [vmem:[%s11 + $0x20] sm:$0xff]
      %v1117 = vld [vmem:[%s11 + $0x28] sm:$0xff]
      %v1118 = vld [vmem:[%s11 + $0x30] sm:$0xff]
      %v1119 = vld [vmem:[%s11 + $0x38] sm:$0xff]
      %v1120 = vld [vmem:[%s11 + $0x40] sm:$0xff]
      %v1121 = vld [vmem:[%s11 + $0x48] sm:$0xff]
      %v1122 = vld [vmem:[%s11 + $0x50] sm:$0xff]
      %v1123 = vld [vmem:[%s11 + $0x58] sm:$0xff]
      %v1124 = vld [vmem:[%s11 + $0x60] sm:$0xff]
      %v1125 = vld [vmem:[%s11 + $0x68] sm:$0xff]
      %v1126 = vld [vmem:[%s11 + $0x70] sm:$0xff]
      %v1127 = vld [vmem:[%s11 + $0x78] sm:$0xff]
      %v1128 = vld [vmem:[%s11 + $0x80] sm:$0xff]
      %v1129 = vld [vmem:[%s11 + $0x88] sm:$0xff]
      %v1130 = vld [vmem:[%s11 + $0x90] sm:$0xff]
      %v1131 = vld [vmem:[%s11 + $0x98] sm:$0xff]
      %v1132 = vld [vmem:[%s11 + $0xa0] sm:$0xff]
      %v1133 = vld [vmem:[%s11 + $0xa8] sm:$0xff]
      %v1134 = vld [vmem:[%s11 + $0xb0] sm:$0xff]
      %v1135 = vld [vmem:[%s11 + $0xb8] sm:$0xff]
      %v1136 = vld [vmem:[%s11 + $0xc0] sm:$0xff]
      %v1137 = vld [vmem:[%s11 + $0xc8] sm:$0xff]
      %v1138 = vld [vmem:[%s11 + $0xd0] sm:$0xff]
      %v1139 = vld [vmem:[%s11 + $0xd8] sm:$0xff]
      %v1140 = vld [vmem:[%s11 + $0xe0] sm:$0xff]
      %v1141 = vld [vmem:[%s11 + $0xe8] sm:$0xff]
      %v1142 = vld [vmem:[%s11 + $0xf0] sm:$0xff]
      %v1143 = vld [vmem:[%s11 + $0xf8] sm:$0xff]
      %v1144 = vld [vmem:[#allocation16] sm:$0x1]
      %v1146 = vperm.slane %v1144, 0
      %1148 = vmatpush.msra.mxu0 %v1127
      %1149 = vmatpush.msra.mxu0 %v1126
      %1150 = vmatpush.msra.mxu0 %v1125
      %1151 = vmatpush.msra.mxu0 %v1124
      %1152 = vmatpush.msra.mxu0 %v1123
      %1153 = vmatpush.msra.mxu0 %v1122
      %1154 = vmatpush.msra.mxu0 %v1121
      %1155 = vmatpush.msra.mxu0 %v1120
      %1156 = vmatpush.msra.mxu0 %v1119
      %1157 = vmatpush.msra.mxu0 %v1118
      %1158 = vmatpush.msra.mxu0 %v1117
      %1159 = vmatpush.msra.mxu0 %v1116
      %1160 = vmatpush.msra.mxu0 %v1115
      %1161 = vmatpush.msra.mxu0 %v1114
      %1162 = vmatpush.msra.mxu0 %v1113
      %1163 = vmatpush.msra.mxu0 %v1112
      %1164 = vmatmul.f32.gmra.mxu0 %v1111
      %v1165 = vpop.f32.mrf.mxu0
      %v1166 = vadd.f32 %v1146, %v1165
      %1167 = vdwg.mxu0
      %1168 = vmatpush.msra.mxu0 %v1143
      %1169 = vmatpush.msra.mxu0 %v1142
      %1170 = vmatpush.msra.mxu0 %v1141
      %1171 = vmatpush.msra.mxu0 %v1140
      %1172 = vmatpush.msra.mxu0 %v1139
      %1173 = vmatpush.msra.mxu0 %v1138
      %1174 = vmatpush.msra.mxu0 %v1137
      %1175 = vmatpush.msra.mxu0 %v1136
      %1176 = vmatpush.msra.mxu0 %v1135
      %1177 = vmatpush.msra.mxu0 %v1134
      %1178 = vmatpush.msra.mxu0 %v1133
      %1179 = vmatpush.msra.mxu0 %v1132
      %1180 = vmatpush.msra.mxu0 %v1131
      %1181 = vmatpush.msra.mxu0 %v1130
      %1182 = vmatpush.msra.mxu0 %v1129
      %1183 = vmatpush.msra.mxu0 %v1128
      %1184 = vmatmul.f32.gmra.mxu0 %v1108
      %v1185 = vpop.f32.mrf.mxu0
      %v1186 = vadd.f32 %v1166, %v1185
      %1187 = vdwg.mxu0
      %1188 = vst [vmem:[#allocation18] sm:$0xff] %v1186
    $region317: #{subsequent_attribute_predictor_forward.1} parent=1 // pred_fallthru
      _
    // Predicated region
    $region318: #{subsequent_attribute_predictor_forward.1} parent=1 // pred_check
      _
    $region319: #{subsequent_attribute_predictor_forward.1} parent=1 // pred_check_branch
      %1190 = sbr.rel (0) target = $region321
    $region320: #{subsequent_attribute_predictor_forward.1} parent=1 // pred_region
      %1192 = vsyncadd [#allocation9], 0
      %s1194 = sshll.u32 [#allocation18], 4
      %s1195 = int_to_ptr.vmem [resolvable:$true] %s1194
      %s1196 = sshll.u32 %s13, 4
      %s1197 = int_to_ptr.hbm [resolvable:$true] %s1196
      %1199 = dma.vmem_to_hbm [thread:$0]  %s1195, 128, %s1197, [#allocation9]
    $region321: #{subsequent_attribute_predictor_forward.1} parent=1 // pred_fallthru
      _
    // Predicated region
    $region322: #{subsequent_attribute_predictor_forward.1} parent=1 // pred_check
      _
    $region323: #{subsequent_attribute_predictor_forward.1} parent=1 // pred_check_branch
      %1201 = sbr.rel (0) target = $region325
    $region324: #{subsequent_attribute_predictor_forward.1} parent=1 // pred_region
      %1203 = dma.done [#allocation9], 128
    $region325: #{subsequent_attribute_predictor_forward.1} parent=1 // pred_fallthru
      _
    %1204 = vsyncpa [#allocation8], 1
    %1205 = vsyncpa [#allocation11], 1
    %1206 = vsyncpa [#allocation14], 1
    %1207 = vsyncpa [#allocation17], 1
    %1208 = vsyncpa [#allocation9], 1
  %1209 = vsyncmov [#allocation4]
  %s1210 = vpop.sfrf %1209
  %p1211 = scmp.eq.s32.totalorder %s1210, 0
  %p1212 = pneg %p1211
  %1214 = shalt.err (%p1212)
  %s1215 = scalar_lea.sflag [#allocation4], 1
  %1216 = vsyncmov %s1215
  %s1217 = vpop.sfrf %1216
  %p1218 = scmp.eq.s32.totalorder %s1217, 0
  %p1219 = pneg %p1218
  %1221 = shalt.err (%p1219)
  %s1222 = scalar_lea.sflag [#allocation4], 2
  %1223 = vsyncmov %s1222
  %s1224 = vpop.sfrf %1223
  %p1225 = scmp.eq.s32.totalorder %s1224, 0
  %p1226 = pneg %p1225
  %1228 = shalt.err (%p1226)
  %s1229 = scalar_lea.sflag [#allocation4], 3
  %1230 = vsyncmov %s1229
  %s1231 = vpop.sfrf %1230
  %p1232 = scmp.eq.s32.totalorder %s1231, 0
  %p1233 = pneg %p1232
  %1235 = shalt.err (%p1233)
  %s1236 = scalar_lea.sflag [#allocation4], 4
  %1237 = vsyncmov %s1236
  %s1238 = vpop.sfrf %1237
  %p1239 = scmp.eq.s32.totalorder %s1238, 0
  %p1240 = pneg %p1239
  %1242 = shalt.err (%p1240)
  %s1243 = scalar_lea.sflag [#allocation4], 5
  %1244 = vsyncmov %s1243
  %s1245 = vpop.sfrf %1244
  %p1246 = scmp.eq.s32.totalorder %s1245, 0
  %p1247 = pneg %p1246
  %1249 = shalt.err (%p1247)
  %s1250 = scalar_lea.sflag [#allocation4], 6
  %1251 = vsyncmov %s1250
  %s1252 = vpop.sfrf %1251
  %p1253 = scmp.eq.s32.totalorder %s1252, 0
  %p1254 = pneg %p1253
  %1256 = shalt.err (%p1254)
  %s1257 = scalar_lea.sflag [#allocation4], 7
  %1258 = vsyncmov %s1257
  %s1259 = vpop.sfrf %1258
  %p1260 = scmp.eq.s32.totalorder %s1259, 0
  %p1261 = pneg %p1260
  %1263 = shalt.err (%p1261)

</llo_original>
